<compile_context>
chip_gen: v7x
topology: tpu7x:2x2x1
jax: 0.10.0
libtpu: 0.0.40
codegen_flags: <defaults>
</compile_context>

<pallas_src>
import numpy as np
import jax
import jax.numpy as jnp
from jax.experimental import pallas as pl
from jax.experimental.pallas import tpu as pltpu

# ---- small, module-consistent shapes ----
B, S = 2, 8
BS = B * S                # flattened batch*seq rows
D_IN = 12                 # input_dim, must divide by nhead=6
D_OUT = 16                # output_dim
NHEAD = 6
HEAD_DIM = D_IN // NHEAD
NR = NHEAD * BS           # stacked-head rows
D_FF = 64
EPS = 1e-5
SCALE = 1.0 / float(np.sqrt(HEAD_DIM))

# power-of-two shift constants (avoid integer div/mod on vectors in-kernel)
assert S & (S - 1) == 0 and BS & (BS - 1) == 0 and HEAD_DIM & (HEAD_DIM - 1) == 0
LOG2_S = int(np.log2(S))
LOG2_BS = int(np.log2(BS))
LOG2_HD = int(np.log2(HEAD_DIM))

# ---- single parameter slab layout: (SLAB_ROWS, 128) f32, all offsets 8-aligned ----
SLAB_LANES = 128
R_CONV0, R_CONV1, R_CONV2 = 0, 16, 32      # conv taps, each (D_IN, D_OUT)
R_QKV = 48                                 # (D_IN, 3*D_IN)  = Wq.T | Wk.T | Wv.T
R_WO = 64                                  # (D_IN, D_IN)
R_W1 = 80                                  # (D_IN, D_FF)
R_W2 = 96                                  # (D_FF, D_IN)
R_WFC = 160                                # (D_IN, D_OUT)
R_WCLS = 176                               # (D_OUT, D_OUT)
R_BIAS = 192                               # 11 bias rows (padded to 16)
SLAB_ROWS = 208
# bias sub-rows inside the slab
B_CONV, B_QKV, B_O, B_G1, B_BE1, B_B1, B_B2, B_G2, B_BE2, B_FC, B_CLS = range(11)


def mynet_kernel(x_ref, slab_ref, wmix_ref, out_ref):
    x = x_ref[...]                                            # (BS, D_IN) f32

    # ---- static masks, built first so VPU work hides under the MXU chain ----
    r_i = jax.lax.broadcasted_iota(jnp.int32, (NR, D_IN), 0)
    c_i = jax.lax.broadcasted_iota(jnp.int32, (NR, D_IN), 1)
    head_mask = ((r_i >> LOG2_BS) == (c_i >> LOG2_HD)).astype(jnp.float32)
    s_r = jax.lax.broadcasted_iota(jnp.int32, (NR, BS), 0)
    s_c = jax.lax.broadcasted_iota(jnp.int32, (NR, BS), 1)
    same_batch = ((s_r & (BS - 1)) >> LOG2_S) == (s_c >> LOG2_S)
    row = jax.lax.broadcasted_iota(jnp.int32, (BS, 1), 0)
    pos = row & (S - 1)                                       # position within a sequence

    # ---- unpack the single parameter slab (static, 8-aligned row slices) ----
    def brow(i, w):
        return slab_ref[R_BIAS + i:R_BIAS + i + 1, 0:w]

    w_c0 = slab_ref[R_CONV0:R_CONV0 + D_IN, 0:D_OUT]
    w_c1 = slab_ref[R_CONV1:R_CONV1 + D_IN, 0:D_OUT]
    w_c2 = slab_ref[R_CONV2:R_CONV2 + D_IN, 0:D_OUT]
    w_qkv = slab_ref[R_QKV:R_QKV + D_IN, 0:3 * D_IN]
    w_o = slab_ref[R_WO:R_WO + D_IN, 0:D_IN]
    w_1 = slab_ref[R_W1:R_W1 + D_IN, 0:D_FF]
    w_2 = slab_ref[R_W2:R_W2 + D_FF, 0:D_IN]
    w_fc = slab_ref[R_WFC:R_WFC + D_IN, 0:D_OUT]
    w_cls = slab_ref[R_WCLS:R_WCLS + D_OUT, 0:D_OUT]

    # ---------- CNN branch: Conv1d(k=3, pad=1) + ReLU ----------
    # per-sequence position masks keep the k=3 window from leaking across batch items
    x_prev = jnp.where(pos == 0, 0.0, jnp.roll(x, 1, axis=0))       # x[s-1]
    x_next = jnp.where(pos == S - 1, 0.0, jnp.roll(x, -1, axis=0))  # x[s+1]
    cnn = (jnp.dot(x_prev, w_c0, preferred_element_type=jnp.float32)
           + jnp.dot(x, w_c1, preferred_element_type=jnp.float32)
           + jnp.dot(x_next, w_c2, preferred_element_type=jnp.float32)
           + brow(B_CONV, D_OUT))
    cnn = jnp.maximum(cnn, 0.0)                               # (BS, D_OUT)

    # ---------- Transformer branch ----------
    # fused Q|K|V projection: one matmul + one packed bias row, then lane slices
    qkv = jnp.dot(x, w_qkv, preferred_element_type=jnp.float32) + brow(B_QKV, 3 * D_IN)
    q = qkv[:, 0:D_IN]
    k = qkv[:, D_IN:2 * D_IN]
    v = qkv[:, 2 * D_IN:3 * D_IN]

    # all NHEAD heads + whole batch in one stacked pass
    q_stk = jnp.broadcast_to(q[None], (NHEAD, BS, D_IN)).reshape(NR, D_IN) * head_mask
    s = jax.lax.dot_general(q_stk, k, (((1,), (1,)), ((), ())),
                            preferred_element_type=jnp.float32) * SCALE   # (NR, BS)
    s = jnp.where(same_batch, s, -1e30)                       # block-diag batch mask
    s = s - jnp.max(s, axis=-1, keepdims=True)
    p = jnp.exp(s)
    p = p * pl.reciprocal(jnp.sum(p, axis=-1, keepdims=True), approx=True)
    ah = jnp.dot(p, v, preferred_element_type=jnp.float32) * head_mask    # (NR, D_IN)
    attn = ah.reshape(NHEAD, BS, D_IN).sum(axis=0)                        # (BS, D_IN)
    attn = jnp.dot(attn, w_o, preferred_element_type=jnp.float32) + brow(B_O, D_IN)

    def layernorm(z, g, b):
        mu = jnp.mean(z, axis=-1, keepdims=True)
        d = z - mu
        var = jnp.mean(d * d, axis=-1, keepdims=True)
        return d * jax.lax.rsqrt(var + EPS) * g + b

    x1 = layernorm(x + attn, brow(B_G1, D_IN), brow(B_BE1, D_IN))
    ff = jnp.dot(x1, w_1, preferred_element_type=jnp.float32) + brow(B_B1, D_FF)
    ff = jnp.maximum(ff, 0.0)
    ff = jnp.dot(ff, w_2, preferred_element_type=jnp.float32) + brow(B_B2, D_IN)
    x2 = layernorm(x1 + ff, brow(B_G2, D_IN), brow(B_BE2, D_IN))
    trans = jnp.dot(x2, w_fc, preferred_element_type=jnp.float32) + brow(B_FC, D_OUT)

    # ---------- weighted merge + classifier ----------
    mixed = wmix_ref[0] * cnn + wmix_ref[1] * trans            # scalars from SMEM
    out_ref[...] = (jnp.dot(mixed, w_cls, preferred_element_type=jnp.float32)
                    + brow(B_CLS, D_OUT))


def make_params(key):
    ks = jax.random.split(key, 16)
    g = lambda k, shape, scale=0.1: (scale * jax.random.normal(k, shape)).astype(jnp.float32)
    return dict(
        conv_w=g(ks[0], (D_OUT, D_IN, 3)), conv_b=g(ks[1], (D_OUT,)),
        wq=g(ks[2], (D_IN, D_IN)), bq=g(ks[3], (D_IN,)),
        wk=g(ks[4], (D_IN, D_IN)), bk=g(ks[5], (D_IN,)),
        wv=g(ks[6], (D_IN, D_IN)), bv=g(ks[7], (D_IN,)),
        wo=g(ks[8], (D_IN, D_IN)), bo=g(ks[9], (D_IN,)),
        g1=jnp.ones((D_IN,), jnp.float32), be1=jnp.zeros((D_IN,), jnp.float32),
        w1=g(ks[10], (D_FF, D_IN)), b1=g(ks[11], (D_FF,)),
        w2=g(ks[12], (D_IN, D_FF)), b2=g(ks[13], (D_IN,)),
        g2=jnp.ones((D_IN,), jnp.float32), be2=jnp.zeros((D_IN,), jnp.float32),
        wfc=g(ks[14], (D_OUT, D_IN)), bfc=g(ks[15], (D_OUT,)),
        wcls=g(jax.random.fold_in(key, 100), (D_OUT, D_OUT)),
        bcls=g(jax.random.fold_in(key, 101), (D_OUT,)),
        w_cnn=jnp.ones((1,), jnp.float32), w_tr=jnp.ones((1,), jnp.float32),
    )


def pack_params(p):
    """One-time host-side packing of all parameters into a single (208,128) slab
    plus two SMEM mix scalars. Runs OUTSIDE the per-call hot path."""
    slab = np.zeros((SLAB_ROWS, SLAB_LANES), np.float32)
    conv = np.asarray(p["conv_w"])                             # (D_OUT, D_IN, 3)
    slab[R_CONV0:R_CONV0 + D_IN, 0:D_OUT] = conv[:, :, 0].T
    slab[R_CONV1:R_CONV1 + D_IN, 0:D_OUT] = conv[:, :, 1].T
    slab[R_CONV2:R_CONV2 + D_IN, 0:D_OUT] = conv[:, :, 2].T
    slab[R_QKV:R_QKV + D_IN, 0:D_IN] = np.asarray(p["wq"]).T
    slab[R_QKV:R_QKV + D_IN, D_IN:2 * D_IN] = np.asarray(p["wk"]).T
    slab[R_QKV:R_QKV + D_IN, 2 * D_IN:3 * D_IN] = np.asarray(p["wv"]).T
    slab[R_WO:R_WO + D_IN, 0:D_IN] = np.asarray(p["wo"]).T
    slab[R_W1:R_W1 + D_IN, 0:D_FF] = np.asarray(p["w1"]).T
    slab[R_W2:R_W2 + D_FF, 0:D_IN] = np.asarray(p["w2"]).T
    slab[R_WFC:R_WFC + D_IN, 0:D_OUT] = np.asarray(p["wfc"]).T
    slab[R_WCLS:R_WCLS + D_OUT, 0:D_OUT] = np.asarray(p["wcls"]).T
    b = R_BIAS
    slab[b + B_CONV, 0:D_OUT] = np.asarray(p["conv_b"])
    slab[b + B_QKV, 0:D_IN] = np.asarray(p["bq"])
    slab[b + B_QKV, D_IN:2 * D_IN] = np.asarray(p["bk"])
    slab[b + B_QKV, 2 * D_IN:3 * D_IN] = np.asarray(p["bv"])
    slab[b + B_O, 0:D_IN] = np.asarray(p["bo"])
    slab[b + B_G1, 0:D_IN] = np.asarray(p["g1"])
    slab[b + B_BE1, 0:D_IN] = np.asarray(p["be1"])
    slab[b + B_B1, 0:D_FF] = np.asarray(p["b1"])
    slab[b + B_B2, 0:D_IN] = np.asarray(p["b2"])
    slab[b + B_G2, 0:D_IN] = np.asarray(p["g2"])
    slab[b + B_BE2, 0:D_IN] = np.asarray(p["be2"])
    slab[b + B_FC, 0:D_OUT] = np.asarray(p["bfc"])
    slab[b + B_CLS, 0:D_OUT] = np.asarray(p["bcls"])
    wmix = np.concatenate([np.asarray(p["w_cnn"]),
                           np.asarray(p["w_tr"])]).astype(np.float32)
    return jnp.asarray(slab), jnp.asarray(wmix)


def mynet_forward(x, slab, wmix):
    """Hot path: reshape + one pallas_call (3 inputs, no grid)."""
    Bx, Sx, Din = x.shape
    x_flat = x.reshape(Bx * Sx, Din)
    out = pl.pallas_call(
        mynet_kernel,
        out_shape=jax.ShapeDtypeStruct((Bx * Sx, D_OUT), jnp.float32),
        in_specs=[pl.BlockSpec(memory_space=pltpu.MemorySpace.VMEM),   # x
                  pl.BlockSpec(memory_space=pltpu.MemorySpace.VMEM),   # param slab
                  pl.BlockSpec(memory_space=pltpu.MemorySpace.SMEM)],  # mix scalars
        out_specs=pl.BlockSpec(memory_space=pltpu.MemorySpace.VMEM),
    )(x_flat, slab, wmix)
    return out.reshape(Bx, Sx, D_OUT)


def mynet_ref(x, p):
    """Pure-JAX reference with identical semantics (for a correctness check)."""
    # CNN branch
    xp = jnp.pad(x, ((0, 0), (1, 1), (0, 0)))
    w = p["conv_w"]
    cnn = (xp[:, 0:S] @ w[:, :, 0].T + xp[:, 1:S + 1] @ w[:, :, 1].T
           + xp[:, 2:S + 2] @ w[:, :, 2].T + p["conv_b"])
    cnn = jnp.maximum(cnn, 0.0)
    # Transformer branch
    q = x @ p["wq"].T + p["bq"]
    k = x @ p["wk"].T + p["bk"]
    v = x @ p["wv"].T + p["bv"]
    split = lambda t: t.reshape(x.shape[0], S, NHEAD, HEAD_DIM)
    qh, kh, vh = split(q), split(k), split(v)
    s = jnp.einsum("bqhd,bkhd->bhqk", qh, kh) / np.sqrt(HEAD_DIM)
    pm = jax.nn.softmax(s, axis=-1)
    attn = jnp.einsum("bhqk,bkhd->bqhd", pm, vh).reshape(x.shape[0], S, D_IN)
    attn = attn @ p["wo"].T + p["bo"]
    ln = lambda z, g, b: ((z - z.mean(-1, keepdims=True))
                          / jnp.sqrt(((z - z.mean(-1, keepdims=True)) ** 2).mean(-1, keepdims=True) + EPS)
                          * g + b)
    x1 = ln(x + attn, p["g1"], p["be1"])
    ff = jnp.maximum(x1 @ p["w1"].T + p["b1"], 0.0) @ p["w2"].T + p["b2"]
    x2 = ln(x1 + ff, p["g2"], p["be2"])
    trans = x2 @ p["wfc"].T + p["bfc"]
    mixed = p["w_cnn"] * cnn + p["w_tr"] * trans
    return mixed @ p["wcls"].T + p["bcls"]


if __name__ == "__main__":
    kx, _ = jax.random.split(jax.random.PRNGKey(0))
    x = jax.random.normal(kx, (B, S, D_IN), dtype=jnp.float32)
    params = make_params(jax.random.PRNGKey(42))

    # one-time parameter packing, outside the per-call hot path
    slab, wmix = pack_params(params)
    fwd = jax.jit(mynet_forward)

    out = jax.block_until_ready(fwd(x, slab, wmix))

    ref = mynet_ref(x, params)
    assert out.shape == (B, S, D_OUT)
    # tolerance relaxed from 2e-4 to 2e-3 because the softmax denominator now
    # uses the EUP approximate reciprocal (pl.reciprocal(..., approx=True))
    np.testing.assert_allclose(np.asarray(out), np.asarray(ref), rtol=2e-3, atol=2e-3)
    print("KERNEL_OK")
</pallas_src>

<mosaic_0001>
module attributes {stable_mosaic.version = 11 : i64} {
  func.func @mynet_kernel(%arg0: memref<16x12xf32, #tpu.memory_space<vmem>>, %arg1: memref<208x128xf32, #tpu.memory_space<vmem>>, %arg2: memref<2xf32, #tpu.memory_space<smem>>, %arg3: memref<16x16xf32, #tpu.memory_space<vmem>>) attributes {dimension_semantics = [], scalar_prefetch = 0 : i64, scratch_operands = 0 : i64, tpu.core_type = #tpu.core_type<tc>} {
    %c0 = arith.constant 0 : index
    %c0_0 = arith.constant 0 : index
    %0 = vector.load %arg0[%c0, %c0_0] : memref<16x12xf32, #tpu.memory_space<vmem>>, vector<16x12xf32>
    %1 = tpu.iota {dimensions = array<i32: 0>} : vector<96x12xi32>
    %2 = tpu.iota {dimensions = array<i32: 1>} : vector<96x12xi32>
    %c4_i32 = arith.constant 4 : i32
    %3 = vector.broadcast %c4_i32 : i32 to vector<96x12xi32>
    %4 = arith.shrsi %1, %3 : vector<96x12xi32>
    %c1_i32 = arith.constant 1 : i32
    %5 = vector.broadcast %c1_i32 : i32 to vector<96x12xi32>
    %6 = arith.shrsi %2, %5 : vector<96x12xi32>
    %7 = arith.cmpi eq, %4, %6 : vector<96x12xi32>
    %8 = arith.extui %7 : vector<96x12xi1> to vector<96x12xi32>
    %9 = arith.sitofp %8 : vector<96x12xi32> to vector<96x12xf32>
    %10 = tpu.iota {dimensions = array<i32: 0>} : vector<96x16xi32>
    %11 = tpu.iota {dimensions = array<i32: 1>} : vector<96x16xi32>
    %c15_i32 = arith.constant 15 : i32
    %12 = vector.broadcast %c15_i32 : i32 to vector<96x16xi32>
    %13 = arith.andi %10, %12 : vector<96x16xi32>
    %c3_i32 = arith.constant 3 : i32
    %14 = vector.broadcast %c3_i32 : i32 to vector<96x16xi32>
    %15 = arith.shrsi %13, %14 : vector<96x16xi32>
    %c3_i32_1 = arith.constant 3 : i32
    %16 = vector.broadcast %c3_i32_1 : i32 to vector<96x16xi32>
    %17 = arith.shrsi %11, %16 : vector<96x16xi32>
    %18 = arith.cmpi eq, %15, %17 : vector<96x16xi32>
    %19 = tpu.iota {dimensions = array<i32: 0>} : vector<16x1xi32>
    %c7_i32 = arith.constant 7 : i32
    %20 = vector.broadcast %c7_i32 : i32 to vector<16x1xi32>
    %21 = arith.andi %19, %20 : vector<16x1xi32>
    %c0_2 = arith.constant 0 : index
    %c0_3 = arith.constant 0 : index
    %22 = vector.load %arg1[%c0_2, %c0_3] : memref<208x128xf32, #tpu.memory_space<vmem>>, vector<12x16xf32>
    %c16 = arith.constant 16 : index
    %c0_4 = arith.constant 0 : index
    %23 = vector.load %arg1[%c16, %c0_4] : memref<208x128xf32, #tpu.memory_space<vmem>>, vector<12x16xf32>
    %c32 = arith.constant 32 : index
    %c0_5 = arith.constant 0 : index
    %24 = vector.load %arg1[%c32, %c0_5] : memref<208x128xf32, #tpu.memory_space<vmem>>, vector<12x16xf32>
    %c48 = arith.constant 48 : index
    %c0_6 = arith.constant 0 : index
    %25 = vector.load %arg1[%c48, %c0_6] : memref<208x128xf32, #tpu.memory_space<vmem>>, vector<12x36xf32>
    %c64 = arith.constant 64 : index
    %c0_7 = arith.constant 0 : index
    %26 = vector.load %arg1[%c64, %c0_7] : memref<208x128xf32, #tpu.memory_space<vmem>>, vector<12x12xf32>
    %c80 = arith.constant 80 : index
    %c0_8 = arith.constant 0 : index
    %27 = vector.load %arg1[%c80, %c0_8] : memref<208x128xf32, #tpu.memory_space<vmem>>, vector<12x64xf32>
    %c96 = arith.constant 96 : index
    %c0_9 = arith.constant 0 : index
    %28 = vector.load %arg1[%c96, %c0_9] : memref<208x128xf32, #tpu.memory_space<vmem>>, vector<64x12xf32>
    %c160 = arith.constant 160 : index
    %c0_10 = arith.constant 0 : index
    %29 = vector.load %arg1[%c160, %c0_10] : memref<208x128xf32, #tpu.memory_space<vmem>>, vector<12x16xf32>
    %c176 = arith.constant 176 : index
    %c0_11 = arith.constant 0 : index
    %30 = vector.load %arg1[%c176, %c0_11] : memref<208x128xf32, #tpu.memory_space<vmem>>, vector<16x16xf32>
    %c0_i32 = arith.constant 0 : i32
    %31 = vector.broadcast %c0_i32 : i32 to vector<16x1xi32>
    %32 = arith.cmpi eq, %21, %31 : vector<16x1xi32>
    %33 = vector.extract_strided_slice %0 {offsets = [15, 0], sizes = [1, 12], strides = [1, 1]} : vector<16x12xf32> to vector<1x12xf32>
    %34 = vector.extract_strided_slice %0 {offsets = [0, 0], sizes = [15, 12], strides = [1, 1]} : vector<16x12xf32> to vector<15x12xf32>
    %35 = tpu.concatenate %33, %34 in 0 : vector<1x12xf32>, vector<15x12xf32> -> vector<16x12xf32>
    %cst = arith.constant 0.000000e+00 : f32
    %36 = vector.shape_cast %32 : vector<16x1xi1> to vector<16x1xi1>
    %37 = vector.broadcast %36 : vector<16x1xi1> to vector<16x12xi1>
    %38 = vector.broadcast %cst : f32 to vector<16x12xf32>
    %39 = arith.select %37, %38, %35 : vector<16x12xi1>, vector<16x12xf32>
    %c7_i32_12 = arith.constant 7 : i32
    %40 = vector.broadcast %c7_i32_12 : i32 to vector<16x1xi32>
    %41 = arith.cmpi eq, %21, %40 : vector<16x1xi32>
    %42 = vector.extract_strided_slice %0 {offsets = [1, 0], sizes = [15, 12], strides = [1, 1]} : vector<16x12xf32> to vector<15x12xf32>
    %43 = vector.extract_strided_slice %0 {offsets = [0, 0], sizes = [1, 12], strides = [1, 1]} : vector<16x12xf32> to vector<1x12xf32>
    %44 = tpu.concatenate %42, %43 in 0 : vector<15x12xf32>, vector<1x12xf32> -> vector<16x12xf32>
    %cst_13 = arith.constant 0.000000e+00 : f32
    %45 = vector.shape_cast %41 : vector<16x1xi1> to vector<16x1xi1>
    %46 = vector.broadcast %45 : vector<16x1xi1> to vector<16x12xi1>
    %47 = vector.broadcast %cst_13 : f32 to vector<16x12xf32>
    %48 = arith.select %46, %47, %44 : vector<16x12xi1>, vector<16x12xf32>
    %cst_14 = arith.constant dense<0.000000e+00> : vector<16x16xf32>
    %49 = tpu.matmul %39, %22, %cst_14 {dimension_numbers = #tpu.dot_dimension_numbers<[1], [0], [0], [1], [0, 0, 1, 1], [], []>} : vector<16x12xf32>, vector<12x16xf32>, vector<16x16xf32> -> vector<16x16xf32>
    %cst_15 = arith.constant dense<0.000000e+00> : vector<16x16xf32>
    %50 = tpu.matmul %0, %23, %cst_15 {dimension_numbers = #tpu.dot_dimension_numbers<[1], [0], [0], [1], [0, 0, 1, 1], [], []>} : vector<16x12xf32>, vector<12x16xf32>, vector<16x16xf32> -> vector<16x16xf32>
    %51 = arith.addf %49, %50 : vector<16x16xf32>
    %cst_16 = arith.constant dense<0.000000e+00> : vector<16x16xf32>
    %52 = tpu.matmul %48, %24, %cst_16 {dimension_numbers = #tpu.dot_dimension_numbers<[1], [0], [0], [1], [0, 0, 1, 1], [], []>} : vector<16x12xf32>, vector<12x16xf32>, vector<16x16xf32> -> vector<16x16xf32>
    %53 = arith.addf %51, %52 : vector<16x16xf32>
    %c192 = arith.constant 192 : index
    %c0_17 = arith.constant 0 : index
    %54 = vector.load %arg1[%c192, %c0_17] : memref<208x128xf32, #tpu.memory_space<vmem>>, vector<1x16xf32>
    %55 = vector.broadcast %54 : vector<1x16xf32> to vector<16x16xf32>
    %56 = arith.addf %53, %55 : vector<16x16xf32>
    %cst_18 = arith.constant 0.000000e+00 : f32
    %57 = vector.broadcast %cst_18 : f32 to vector<16x16xf32>
    %58 = arith.maximumf %56, %57 : vector<16x16xf32>
    %cst_19 = arith.constant dense<0.000000e+00> : vector<16x36xf32>
    %59 = tpu.matmul %0, %25, %cst_19 {dimension_numbers = #tpu.dot_dimension_numbers<[1], [0], [0], [1], [0, 0, 1, 1], [], []>} : vector<16x12xf32>, vector<12x36xf32>, vector<16x36xf32> -> vector<16x36xf32>
    %c193 = arith.constant 193 : index
    %c0_20 = arith.constant 0 : index
    %60 = vector.load %arg1[%c193, %c0_20] : memref<208x128xf32, #tpu.memory_space<vmem>>, vector<1x36xf32>
    %61 = vector.broadcast %60 : vector<1x36xf32> to vector<16x36xf32>
    %62 = arith.addf %59, %61 : vector<16x36xf32>
    %63 = vector.extract_strided_slice %62 {offsets = [0, 0], sizes = [16, 12], strides = [1, 1]} : vector<16x36xf32> to vector<16x12xf32>
    %64 = vector.extract_strided_slice %62 {offsets = [0, 12], sizes = [16, 12], strides = [1, 1]} : vector<16x36xf32> to vector<16x12xf32>
    %65 = vector.extract_strided_slice %62 {offsets = [0, 24], sizes = [16, 12], strides = [1, 1]} : vector<16x36xf32> to vector<16x12xf32>
    %66 = vector.shape_cast %63 : vector<16x12xf32> to vector<1x16x12xf32>
    %67 = vector.shape_cast %66 : vector<1x16x12xf32> to vector<1x16x12xf32>
    %68 = vector.broadcast %67 : vector<1x16x12xf32> to vector<6x16x12xf32>
    %69 = vector.shape_cast %68 : vector<6x16x12xf32> to vector<96x12xf32>
    %70 = arith.mulf %69, %9 : vector<96x12xf32>
    %cst_21 = arith.constant dense<0.000000e+00> : vector<96x16xf32>
    %71 = tpu.matmul %70, %64, %cst_21 {dimension_numbers = #tpu.dot_dimension_numbers<[1], [1], [0], [0], [0, 0, 1, 0], [], []>} : vector<96x12xf32>, vector<16x12xf32>, vector<96x16xf32> -> vector<96x16xf32>
    %cst_22 = arith.constant 0.707106769 : f32
    %72 = vector.broadcast %cst_22 : f32 to vector<96x16xf32>
    %73 = arith.mulf %71, %72 : vector<96x16xf32>
    %cst_23 = arith.constant -1.000000e+30 : f32
    %74 = vector.broadcast %cst_23 : f32 to vector<96x16xf32>
    %75 = arith.select %18, %73, %74 : vector<96x16xi1>, vector<96x16xf32>
    %cst_24 = arith.constant dense<0xFF800000> : vector<96xf32>
    %76 = vector.multi_reduction <maximumf>, %75, %cst_24 [1] : vector<96x16xf32> to vector<96xf32>
    %77 = vector.shape_cast %76 : vector<96xf32> to vector<96x1xf32>
    %78 = vector.broadcast %77 : vector<96x1xf32> to vector<96x16xf32>
    %79 = arith.subf %75, %78 : vector<96x16xf32>
    %80 = math.exp %79 : vector<96x16xf32>
    %cst_25 = arith.constant dense<0.000000e+00> : vector<96xf32>
    %81 = vector.multi_reduction <add>, %80, %cst_25 [1] : vector<96x16xf32> to vector<96xf32>
    %82 = vector.shape_cast %81 : vector<96xf32> to vector<96x1xf32>
    %83 = tpu.reciprocal %82 {approx = true} : vector<96x1xf32> -> vector<96x1xf32>
    %84 = vector.broadcast %83 : vector<96x1xf32> to vector<96x16xf32>
    %85 = arith.mulf %80, %84 : vector<96x16xf32>
    %cst_26 = arith.constant dense<0.000000e+00> : vector<96x12xf32>
    %86 = tpu.matmul %85, %65, %cst_26 {dimension_numbers = #tpu.dot_dimension_numbers<[1], [0], [0], [1], [0, 0, 1, 1], [], []>} : vector<96x16xf32>, vector<16x12xf32>, vector<96x12xf32> -> vector<96x12xf32>
    %87 = arith.mulf %86, %9 : vector<96x12xf32>
    %88 = vector.shape_cast %87 : vector<96x12xf32> to vector<6x16x12xf32>
    %cst_27 = arith.constant dense<0.000000e+00> : vector<16x12xf32>
    %89 = vector.multi_reduction <add>, %88, %cst_27 [0] : vector<6x16x12xf32> to vector<16x12xf32>
    %cst_28 = arith.constant dense<0.000000e+00> : vector<16x12xf32>
    %90 = tpu.matmul %89, %26, %cst_28 {dimension_numbers = #tpu.dot_dimension_numbers<[1], [0], [0], [1], [0, 0, 1, 1], [], []>} : vector<16x12xf32>, vector<12x12xf32>, vector<16x12xf32> -> vector<16x12xf32>
    %c194 = arith.constant 194 : index
    %c0_29 = arith.constant 0 : index
    %91 = vector.load %arg1[%c194, %c0_29] : memref<208x128xf32, #tpu.memory_space<vmem>>, vector<1x12xf32>
    %92 = vector.broadcast %91 : vector<1x12xf32> to vector<16x12xf32>
    %93 = arith.addf %90, %92 : vector<16x12xf32>
    %94 = arith.addf %0, %93 : vector<16x12xf32>
    %c195 = arith.constant 195 : index
    %c0_30 = arith.constant 0 : index
    %95 = vector.load %arg1[%c195, %c0_30] : memref<208x128xf32, #tpu.memory_space<vmem>>, vector<1x12xf32>
    %c196 = arith.constant 196 : index
    %c0_31 = arith.constant 0 : index
    %96 = vector.load %arg1[%c196, %c0_31] : memref<208x128xf32, #tpu.memory_space<vmem>>, vector<1x12xf32>
    %cst_32 = arith.constant dense<0.000000e+00> : vector<16xf32>
    %97 = vector.multi_reduction <add>, %94, %cst_32 [1] : vector<16x12xf32> to vector<16xf32>
    %98 = vector.shape_cast %97 : vector<16xf32> to vector<16x1xf32>
    %cst_33 = arith.constant 1.200000e+01 : f32
    %99 = vector.broadcast %cst_33 : f32 to vector<16x1xf32>
    %100 = arith.divf %98, %99 : vector<16x1xf32>
    %101 = vector.broadcast %100 : vector<16x1xf32> to vector<16x12xf32>
    %102 = arith.subf %94, %101 : vector<16x12xf32>
    %103 = arith.mulf %102, %102 : vector<16x12xf32>
    %cst_34 = arith.constant dense<0.000000e+00> : vector<16xf32>
    %104 = vector.multi_reduction <add>, %103, %cst_34 [1] : vector<16x12xf32> to vector<16xf32>
    %105 = vector.shape_cast %104 : vector<16xf32> to vector<16x1xf32>
    %cst_35 = arith.constant 1.200000e+01 : f32
    %106 = vector.broadcast %cst_35 : f32 to vector<16x1xf32>
    %107 = arith.divf %105, %106 : vector<16x1xf32>
    %cst_36 = arith.constant 9.99999974E-6 : f32
    %108 = vector.broadcast %cst_36 : f32 to vector<16x1xf32>
    %109 = arith.addf %107, %108 : vector<16x1xf32>
    %110 = math.rsqrt %109 : vector<16x1xf32>
    %111 = vector.broadcast %110 : vector<16x1xf32> to vector<16x12xf32>
    %112 = arith.mulf %102, %111 : vector<16x12xf32>
    %113 = vector.broadcast %95 : vector<1x12xf32> to vector<16x12xf32>
    %114 = arith.mulf %112, %113 : vector<16x12xf32>
    %115 = vector.broadcast %96 : vector<1x12xf32> to vector<16x12xf32>
    %116 = arith.addf %114, %115 : vector<16x12xf32>
    %cst_37 = arith.constant dense<0.000000e+00> : vector<16x64xf32>
    %117 = tpu.matmul %116, %27, %cst_37 {dimension_numbers = #tpu.dot_dimension_numbers<[1], [0], [0], [1], [0, 0, 1, 1], [], []>} : vector<16x12xf32>, vector<12x64xf32>, vector<16x64xf32> -> vector<16x64xf32>
    %c197 = arith.constant 197 : index
    %c0_38 = arith.constant 0 : index
    %118 = vector.load %arg1[%c197, %c0_38] : memref<208x128xf32, #tpu.memory_space<vmem>>, vector<1x64xf32>
    %119 = vector.broadcast %118 : vector<1x64xf32> to vector<16x64xf32>
    %120 = arith.addf %117, %119 : vector<16x64xf32>
    %cst_39 = arith.constant 0.000000e+00 : f32
    %121 = vector.broadcast %cst_39 : f32 to vector<16x64xf32>
    %122 = arith.maximumf %120, %121 : vector<16x64xf32>
    %cst_40 = arith.constant dense<0.000000e+00> : vector<16x12xf32>
    %123 = tpu.matmul %122, %28, %cst_40 {dimension_numbers = #tpu.dot_dimension_numbers<[1], [0], [0], [1], [0, 0, 1, 1], [], []>} : vector<16x64xf32>, vector<64x12xf32>, vector<16x12xf32> -> vector<16x12xf32>
    %c198 = arith.constant 198 : index
    %c0_41 = arith.constant 0 : index
    %124 = vector.load %arg1[%c198, %c0_41] : memref<208x128xf32, #tpu.memory_space<vmem>>, vector<1x12xf32>
    %125 = vector.broadcast %124 : vector<1x12xf32> to vector<16x12xf32>
    %126 = arith.addf %123, %125 : vector<16x12xf32>
    %127 = arith.addf %116, %126 : vector<16x12xf32>
    %c199 = arith.constant 199 : index
    %c0_42 = arith.constant 0 : index
    %128 = vector.load %arg1[%c199, %c0_42] : memref<208x128xf32, #tpu.memory_space<vmem>>, vector<1x12xf32>
    %c200 = arith.constant 200 : index
    %c0_43 = arith.constant 0 : index
    %129 = vector.load %arg1[%c200, %c0_43] : memref<208x128xf32, #tpu.memory_space<vmem>>, vector<1x12xf32>
    %cst_44 = arith.constant dense<0.000000e+00> : vector<16xf32>
    %130 = vector.multi_reduction <add>, %127, %cst_44 [1] : vector<16x12xf32> to vector<16xf32>
    %131 = vector.shape_cast %130 : vector<16xf32> to vector<16x1xf32>
    %cst_45 = arith.constant 1.200000e+01 : f32
    %132 = vector.broadcast %cst_45 : f32 to vector<16x1xf32>
    %133 = arith.divf %131, %132 : vector<16x1xf32>
    %134 = vector.broadcast %133 : vector<16x1xf32> to vector<16x12xf32>
    %135 = arith.subf %127, %134 : vector<16x12xf32>
    %136 = arith.mulf %135, %135 : vector<16x12xf32>
    %cst_46 = arith.constant dense<0.000000e+00> : vector<16xf32>
    %137 = vector.multi_reduction <add>, %136, %cst_46 [1] : vector<16x12xf32> to vector<16xf32>
    %138 = vector.shape_cast %137 : vector<16xf32> to vector<16x1xf32>
    %cst_47 = arith.constant 1.200000e+01 : f32
    %139 = vector.broadcast %cst_47 : f32 to vector<16x1xf32>
    %140 = arith.divf %138, %139 : vector<16x1xf32>
    %cst_48 = arith.constant 9.99999974E-6 : f32
    %141 = vector.broadcast %cst_48 : f32 to vector<16x1xf32>
    %142 = arith.addf %140, %141 : vector<16x1xf32>
    %143 = math.rsqrt %142 : vector<16x1xf32>
    %144 = vector.broadcast %143 : vector<16x1xf32> to vector<16x12xf32>
    %145 = arith.mulf %135, %144 : vector<16x12xf32>
    %146 = vector.broadcast %128 : vector<1x12xf32> to vector<16x12xf32>
    %147 = arith.mulf %145, %146 : vector<16x12xf32>
    %148 = vector.broadcast %129 : vector<1x12xf32> to vector<16x12xf32>
    %149 = arith.addf %147, %148 : vector<16x12xf32>
    %cst_49 = arith.constant dense<0.000000e+00> : vector<16x16xf32>
    %150 = tpu.matmul %149, %29, %cst_49 {dimension_numbers = #tpu.dot_dimension_numbers<[1], [0], [0], [1], [0, 0, 1, 1], [], []>} : vector<16x12xf32>, vector<12x16xf32>, vector<16x16xf32> -> vector<16x16xf32>
    %c201 = arith.constant 201 : index
    %c0_50 = arith.constant 0 : index
    %151 = vector.load %arg1[%c201, %c0_50] : memref<208x128xf32, #tpu.memory_space<vmem>>, vector<1x16xf32>
    %152 = vector.broadcast %151 : vector<1x16xf32> to vector<16x16xf32>
    %153 = arith.addf %150, %152 : vector<16x16xf32>
    %c0_51 = arith.constant 0 : index
    %154 = memref.load %arg2[%c0_51] : memref<2xf32, #tpu.memory_space<smem>>
    %155 = vector.broadcast %154 : f32 to vector<16x16xf32>
    %156 = arith.mulf %155, %58 : vector<16x16xf32>
    %c1 = arith.constant 1 : index
    %157 = memref.load %arg2[%c1] : memref<2xf32, #tpu.memory_space<smem>>
    %158 = vector.broadcast %157 : f32 to vector<16x16xf32>
    %159 = arith.mulf %158, %153 : vector<16x16xf32>
    %160 = arith.addf %156, %159 : vector<16x16xf32>
    %cst_52 = arith.constant dense<0.000000e+00> : vector<16x16xf32>
    %161 = tpu.matmul %160, %30, %cst_52 {dimension_numbers = #tpu.dot_dimension_numbers<[1], [0], [0], [1], [0, 0, 1, 1], [], []>} : vector<16x16xf32>, vector<16x16xf32>, vector<16x16xf32> -> vector<16x16xf32>
    %c202 = arith.constant 202 : index
    %c0_53 = arith.constant 0 : index
    %162 = vector.load %arg1[%c202, %c0_53] : memref<208x128xf32, #tpu.memory_space<vmem>>, vector<1x16xf32>
    %163 = vector.broadcast %162 : vector<1x16xf32> to vector<16x16xf32>
    %164 = arith.addf %161, %163 : vector<16x16xf32>
    %c0_54 = arith.constant 0 : index
    %c0_55 = arith.constant 0 : index
    %165 = vector.load %arg3[%c0_54, %c0_55] : memref<16x16xf32, #tpu.memory_space<vmem>>, vector<16x16xf32>
    tpu.vector_store %arg3[%c0_54, %c0_55], %164 {strides = array<i32>} : memref<16x16xf32, #tpu.memory_space<vmem>>, vector<16x16xf32>,
    return
  }
}

</mosaic_0001>

<llo_original>
// kernel: mynet_forward.1
$region0: #{mynet_forward.1}
  #allocation0 [shape = 'u32[]', space=smem, size = 0x4, offset = 0x4, fixed_abs, tag = 'smem constant byte address 0x4 - core index']
  #allocation1 [shape = 'u32[144,128]{1,0:T(1,128)}', space=vmem, size = 0x12000, scoped, tag = 'internal scratch']
  %s0 = inlined_call_operand.hbm [shape: f32[16,12], index: 0, kind: input, shape index: {}]
  %s1 = inlined_call_operand.hbm [shape: f32[208,128], index: 1, kind: input, shape index: {}]
  %s2 = inlined_call_operand.vmem [shape: f32[2], index: 2, kind: input, shape index: {}]
  %s3 = inlined_call_operand.hbm [shape: f32[16,16], index: 3, kind: output, shape index: {}]
  %s4 = sld [smem:[#allocation0]]
  $region34: #{mynet_forward.1} parent=0
    _
  %s6 = ssub.s32 1, %s4
  %s7 = scalar_select 0, %s6, %s4
  $region1: #{mynet_forward.1} parent=0
    #allocation2 [shape = 'u8[8192]{0}', space=vmem, size = 0x2000, scoped, tag = 'input window, operand 0, single buffered']
    #allocation3 [shape = 's32[1]{0}', space=sflag, size = 0x4, scoped, tag = 'scoped memory for mynet_forward.1']
    #allocation4 [shape = 's32[1]{0}', space=sflag, size = 0x4, scoped, tag = 'scoped memory for mynet_forward.1']
    #allocation5 [shape = 's32[1]{0}', space=sflag, size = 0x4, scoped, tag = 'scoped memory for mynet_forward.1']
    #allocation6 [shape = 'u8[106496]{0}', space=vmem, size = 0x1a000, scoped, tag = 'input window, operand 1, single buffered']
    #allocation7 [shape = 's32[1]{0}', space=sflag, size = 0x4, scoped, tag = 'scoped memory for mynet_forward.1']
    #allocation8 [shape = 'u8[512]{0}', space=smem, size = 0x200, scoped, tag = 'input window, operand 2, single buffered']
    #allocation9 [shape = 'u8[8192]{0}', space=vmem, size = 0x2000, scoped, tag = 'output window, operand 0, single buffered']
    %8 = vsyncpa [#allocation3], 0
    %9 = vsyncpa [#allocation7], 0
    %10 = vsyncpa [#allocation5], 0
    %11 = vsyncpa [#allocation4], 0
    // Predicated region
    $region2: #{mynet_forward.1} parent=1 // pred_check
      _
    $region3: #{mynet_forward.1} parent=1 // pred_check_branch
      %13 = sbr.rel (0) target = $region5
    $region4: #{mynet_forward.1} parent=1 // pred_region
      %s15 = ssub.s32 256, 256
      %16 = vsyncadd [#allocation3], %s15
      %s17 = sshll.u32 [#allocation2], 4
      %s18 = int_to_ptr.vmem [resolvable:$true] %s17
      %23 = dma.hbm_to_vmem [thread:$0]  %s0, 256, %s18, [#allocation3], 128, 128, 8
    $region5: #{mynet_forward.1} parent=1 // pred_fallthru
      _
    // Predicated region
    $region6: #{mynet_forward.1} parent=1 // pred_check
      _
    $region7: #{mynet_forward.1} parent=1 // pred_check_branch
      %25 = sbr.rel (0) target = $region9
    $region8: #{mynet_forward.1} parent=1 // pred_region
      %s27 = ssub.s32 3328, 3328
      %28 = vsyncadd [#allocation7], %s27
      %s29 = sshll.u32 [#allocation6], 4
      %s30 = int_to_ptr.vmem [resolvable:$true] %s29
      %35 = dma.hbm_to_vmem [thread:$0]  %s1, 3328, %s30, [#allocation7], 128, 128, 8
    $region9: #{mynet_forward.1} parent=1 // pred_fallthru
      _
    // Predicated region
    $region10: #{mynet_forward.1} parent=1 // pred_check
      _
    $region11: #{mynet_forward.1} parent=1 // pred_check_branch
      %37 = sbr.rel (0) target = $region13
    $region12: #{mynet_forward.1} parent=1 // pred_region
      %s39 = ssub.s32 16, 16
      %40 = vsyncadd [#allocation5], %s39
      %s42 = sshll.u32 %s2, 4
      %s43 = int_to_ptr.vmem [resolvable:$true] %s42
      %45 = dma.vmem_to_smem %s43, 16, [#allocation8], [#allocation5]
    $region13: #{mynet_forward.1} parent=1 // pred_fallthru
      _
    // Predicated region
    $region14: #{mynet_forward.1} parent=1 // pred_check
      _
    $region15: #{mynet_forward.1} parent=1 // pred_check_branch
      %47 = sbr.rel (0) target = $region17
    $region16: #{mynet_forward.1} parent=1 // pred_region
      %48 = dma.done [#allocation3], 256
    $region17: #{mynet_forward.1} parent=1 // pred_fallthru
      _
    // Predicated region
    $region18: #{mynet_forward.1} parent=1 // pred_check
      _
    $region19: #{mynet_forward.1} parent=1 // pred_check_branch
      %50 = sbr.rel (0) target = $region21
    $region20: #{mynet_forward.1} parent=1 // pred_region
      %51 = dma.done [#allocation7], 3328
    $region21: #{mynet_forward.1} parent=1 // pred_fallthru
      _
    // Predicated region
    $region22: #{mynet_forward.1} parent=1 // pred_check
      _
    $region23: #{mynet_forward.1} parent=1 // pred_check_branch
      %53 = sbr.rel (0) target = $region25
    $region24: #{mynet_forward.1} parent=1 // pred_region
      %54 = dma.done [#allocation5], 16
    $region25: #{mynet_forward.1} parent=1 // pred_fallthru
      _
    %55 = sfence
    %v56 = vld [vmem:[#allocation2] sm:$0xff]
    %v57 = vld [vmem:[#allocation2 + $0x8] sm:$0xff]
    %v58 = vlaneseq
    %v59 = vshrl.u32 %v58, 7
    %v60 = vadd.s32 %v59, 8
    %v61 = vadd.s32 %v59, 16
    %v62 = vadd.s32 %v59, 24
    %v63 = vadd.s32 %v59, 32
    %v64 = vadd.s32 %v59, 40
    %v65 = vadd.s32 %v59, 48
    %v66 = vadd.s32 %v59, 56
    %v67 = vadd.s32 %v59, 64
    %v68 = vadd.s32 %v59, 72
    %v69 = vadd.s32 %v59, 80
    %v70 = vadd.s32 %v59, 88
    %v71 = vlaneseq
    %v72 = vand.u32 %v71, 127
    %v73 = vshra.s32 %v59, 4
    %v74 = vshra.s32 %v60, 4
    %v75 = vshra.s32 %v61, 4
    %v76 = vshra.s32 %v62, 4
    %v77 = vshra.s32 %v63, 4
    %v78 = vshra.s32 %v64, 4
    %v79 = vshra.s32 %v65, 4
    %v80 = vshra.s32 %v66, 4
    %v81 = vshra.s32 %v67, 4
    %v82 = vshra.s32 %v68, 4
    %v83 = vshra.s32 %v69, 4
    %v84 = vshra.s32 %v70, 4
    %v85 = vshra.s32 %v72, 1
    %vm86 = vcmp.eq.s32.totalorder %v73, %v85
    %vm87 = vcmp.eq.s32.totalorder %v74, %v85
    %vm88 = vcmp.eq.s32.totalorder %v75, %v85
    %vm89 = vcmp.eq.s32.totalorder %v76, %v85
    %vm90 = vcmp.eq.s32.totalorder %v77, %v85
    %vm91 = vcmp.eq.s32.totalorder %v78, %v85
    %vm92 = vcmp.eq.s32.totalorder %v79, %v85
    %vm93 = vcmp.eq.s32.totalorder %v80, %v85
    %vm94 = vcmp.eq.s32.totalorder %v81, %v85
    %vm95 = vcmp.eq.s32.totalorder %v82, %v85
    %vm96 = vcmp.eq.s32.totalorder %v83, %v85
    %vm97 = vcmp.eq.s32.totalorder %v84, %v85
    %v98 = vsel %vm86, 1, 0
    %v99 = vsel %vm87, 1, 0
    %v100 = vsel %vm88, 1, 0
    %v101 = vsel %vm89, 1, 0
    %v102 = vsel %vm90, 1, 0
    %v103 = vsel %vm91, 1, 0
    %v104 = vsel %vm92, 1, 0
    %v105 = vsel %vm93, 1, 0
    %v106 = vsel %vm94, 1, 0
    %v107 = vsel %vm95, 1, 0
    %v108 = vsel %vm96, 1, 0
    %v109 = vsel %vm97, 1, 0
    %v110 = vcvt.s32.f32 %v98
    %v111 = vcvt.s32.f32 %v99
    %v112 = vcvt.s32.f32 %v100
    %v113 = vcvt.s32.f32 %v101
    %v114 = vcvt.s32.f32 %v102
    %v115 = vcvt.s32.f32 %v103
    %v116 = vcvt.s32.f32 %v104
    %v117 = vcvt.s32.f32 %v105
    %v118 = vcvt.s32.f32 %v106
    %v119 = vcvt.s32.f32 %v107
    %v120 = vcvt.s32.f32 %v108
    %v121 = vcvt.s32.f32 %v109
    %v122 = vand.u32 %v59, 15
    %v123 = vand.u32 %v60, 15
    %v124 = vand.u32 %v61, 15
    %v125 = vand.u32 %v62, 15
    %v126 = vand.u32 %v63, 15
    %v127 = vand.u32 %v64, 15
    %v128 = vand.u32 %v65, 15
    %v129 = vand.u32 %v66, 15
    %v130 = vand.u32 %v67, 15
    %v131 = vand.u32 %v68, 15
    %v132 = vand.u32 %v69, 15
    %v133 = vand.u32 %v70, 15
    %v134 = vshra.s32 %v122, 3
    %v135 = vshra.s32 %v123, 3
    %v136 = vshra.s32 %v124, 3
    %v137 = vshra.s32 %v125, 3
    %v138 = vshra.s32 %v126, 3
    %v139 = vshra.s32 %v127, 3
    %v140 = vshra.s32 %v128, 3
    %v141 = vshra.s32 %v129, 3
    %v142 = vshra.s32 %v130, 3
    %v143 = vshra.s32 %v131, 3
    %v144 = vshra.s32 %v132, 3
    %v145 = vshra.s32 %v133, 3
    %v146 = vshra.s32 %v72, 3
    %vm147 = vcmp.eq.s32.totalorder %v134, %v146
    %vm148 = vcmp.eq.s32.totalorder %v135, %v146
    %vm149 = vcmp.eq.s32.totalorder %v136, %v146
    %vm150 = vcmp.eq.s32.totalorder %v137, %v146
    %vm151 = vcmp.eq.s32.totalorder %v138, %v146
    %vm152 = vcmp.eq.s32.totalorder %v139, %v146
    %vm153 = vcmp.eq.s32.totalorder %v140, %v146
    %vm154 = vcmp.eq.s32.totalorder %v141, %v146
    %vm155 = vcmp.eq.s32.totalorder %v142, %v146
    %vm156 = vcmp.eq.s32.totalorder %v143, %v146
    %vm157 = vcmp.eq.s32.totalorder %v144, %v146
    %vm158 = vcmp.eq.s32.totalorder %v145, %v146
    %v159 = vand.u32 %v59, 7
    %v160 = vand.u32 %v60, 7
    %v161 = vld [vmem:[#allocation6] sm:$0xff]
    %v162 = vld [vmem:[#allocation6 + $0x8] sm:$0xf]
    %v163 = vld [vmem:[#allocation6 + $0x10] sm:$0xff]
    %v164 = vld [vmem:[#allocation6 + $0x18] sm:$0xf]
    %v165 = vld [vmem:[#allocation6 + $0x20] sm:$0xff]
    %v166 = vld [vmem:[#allocation6 + $0x28] sm:$0xf]
    %v167 = vld [vmem:[#allocation6 + $0x30] sm:$0xff]
    %v168 = vld [vmem:[#allocation6 + $0x38] sm:$0xf]
    %v169 = vld [vmem:[#allocation6 + $0x40] sm:$0xff]
    %v170 = vld [vmem:[#allocation6 + $0x48] sm:$0xf]
    %v171 = vld [vmem:[#allocation6 + $0x50] sm:$0xff]
    %v172 = vld [vmem:[#allocation6 + $0x58] sm:$0xf]
    %v173 = vld [vmem:[#allocation6 + $0x60] sm:$0xff]
    %v174 = vld [vmem:[#allocation6 + $0x68] sm:$0xff]
    %v175 = vld [vmem:[#allocation6 + $0x70] sm:$0xff]
    %v176 = vld [vmem:[#allocation6 + $0x78] sm:$0xff]
    %v177 = vld [vmem:[#allocation6 + $0x80] sm:$0xff]
    %v178 = vld [vmem:[#allocation6 + $0x88] sm:$0xff]
    %v179 = vld [vmem:[#allocation6 + $0x90] sm:$0xff]
    %v180 = vld [vmem:[#allocation6 + $0x98] sm:$0xff]
    %v181 = vld [vmem:[#allocation6 + $0xa0] sm:$0xff]
    %v182 = vld [vmem:[#allocation6 + $0xa8] sm:$0xf]
    %v183 = vld [vmem:[#allocation6 + $0xb0] sm:$0xff]
    %v184 = vld [vmem:[#allocation6 + $0xb8] sm:$0xff]
    %vm185 = vcmp.eq.s32.totalorder %v159, 0
    %vm186 = vcmp.eq.s32.totalorder %v160, 0
    %v188 = vrot.slane %v57, 7
    %vm191 = vcmask 1040384
    %v192 = vrot.slane %v56, 7
    %v193 = vsel %vm191, %v192, %v188
    %v196 = vsel %vm191, %v188, %v192
    %v197 = vsel %vm185, 1, 0
    %v198 = vsel %vm186, 1, 0
    %vm199 = vcmp.eq.s32.totalorder %v197, 1
    %vm200 = vcmp.eq.s32.totalorder %v198, 1
    %v201 = vsel %vm199, 0.0, %v196
    %v202 = vsel %vm200, 0.0, %v193
    %vm203 = vcmp.eq.s32.totalorder %v159, 7
    %vm204 = vcmp.eq.s32.totalorder %v160, 7
    %vm205 = vcmask 1046528
    %v206 = vrot.slane %v56, 1
    %v207 = vrot.slane %v57, 1
    %v208 = vsel %vm205, %v206, %v207
    %v212 = vsel %vm205, %v207, %v206
    %v213 = vsel %vm203, 1, 0
    %v214 = vsel %vm204, 1, 0
    %vm215 = vcmp.eq.s32.totalorder %v213, 1
    %vm216 = vcmp.eq.s32.totalorder %v214, 1
    %v217 = vsel %vm215, 0.0, %v208
    %v218 = vsel %vm216, 0.0, %v212
    %vm219 = vcmask 97280
    %v220 = vsel %vm219, %v56, 0
    %v222 = vsel %vm219, %v57, 0
    %vm224 = vcmask 1043456
    %v226 = vsel %vm224, %v164, 0
    %228 = vmatprep.subr.mxu0 0.0
    %229 = vmatpush1.msra.mxu0 %v163
    %230 = vmatprep.subr.mxu0 0.0
    %231 = vmatpush1.msra.mxu0 %v226
    %232 = vmatprep.subr.mxu0 0.0
    %233 = vmatpush1.msra.mxu0 0.0
    %234 = vmatprep.subr.mxu0 0.0
    %235 = vmatpush1.msra.mxu0 0.0
    %236 = vmatprep.subr.mxu0 0.0
    %237 = vmatpush1.msra.mxu0 0.0
    %238 = vmatprep.subr.mxu0 0.0
    %239 = vmatpush1.msra.mxu0 0.0
    %240 = vmatprep.subr.mxu0 0.0
    %241 = vmatpush1.msra.mxu0 0.0
    %242 = vmatprep.subr.mxu0 0.0
    %243 = vmatpush1.msra.mxu0 0.0
    %244 = vmatprep.subr.mxu0 0.0
    %245 = vmatpush1.msra.mxu0 0.0
    %246 = vmatprep.subr.mxu0 0.0
    %247 = vmatpush1.msra.mxu0 0.0
    %248 = vmatprep.subr.mxu0 0.0
    %249 = vmatpush1.msra.mxu0 0.0
    %250 = vmatprep.subr.mxu0 0.0
    %251 = vmatpush1.msra.mxu0 0.0
    %252 = vmatprep.subr.mxu0 0.0
    %253 = vmatpush1.msra.mxu0 0.0
    %254 = vmatprep.subr.mxu0 0.0
    %255 = vmatpush1.msra.mxu0 0.0
    %256 = vmatprep.subr.mxu0 0.0
    %257 = vmatpush1.msra.mxu0 0.0
    %258 = vmatprep.subr.mxu0 0.0
    %259 = vmatpush1.msra.mxu0 0.0
    %260 = vmatprep.subr.mxu0 0.0
    %261 = vmatpush1.msra.mxu0 0.0
    %262 = vmatprep.subr.mxu0 0.0
    %263 = vmatpush1.msra.mxu0 0.0
    %264 = vmatprep.subr.mxu0 0.0
    %265 = vmatpush1.msra.mxu0 0.0
    %266 = vmatprep.subr.mxu0 0.0
    %267 = vmatpush1.msra.mxu0 0.0
    %268 = vmatprep.subr.mxu0 0.0
    %269 = vmatpush1.msra.mxu0 0.0
    %270 = vmatprep.subr.mxu0 0.0
    %271 = vmatpush1.msra.mxu0 0.0
    %272 = vmatprep.subr.mxu0 0.0
    %273 = vmatpush1.msra.mxu0 0.0
    %274 = vmatprep.subr.mxu0 0.0
    %275 = vmatpush1.msra.mxu0 0.0
    %276 = vmatprep.subr.mxu0 0.0
    %277 = vmatpush1.msra.mxu0 0.0
    %278 = vmatprep.subr.mxu0 0.0
    %279 = vmatpush1.msra.mxu0 0.0
    %280 = vmatprep.subr.mxu0 0.0
    %281 = vmatpush1.msra.mxu0 0.0
    %282 = vmatprep.subr.mxu0 0.0
    %283 = vmatpush1.msra.mxu0 0.0
    %284 = vmatprep.subr.mxu0 0.0
    %285 = vmatpush1.msra.mxu0 0.0
    %286 = vmatprep.subr.mxu0 0.0
    %287 = vmatpush1.msra.mxu0 0.0
    %288 = vmatprep.subr.mxu0 0.0
    %289 = vmatpush1.msra.mxu0 0.0
    %290 = vmatprep.subr.mxu0 0.0
    %291 = vmatpush1.msra.mxu0 0.0
    %292 = vmatprep.mubr.f32.mxu0 0.0
    %293 = vmatmul.mubr.f32.gmra.mrb[0].mxu0 %v220
    %v294 = vpop.f32.mrb[0].mxu0
    %v295 = vadd.f32 0.0, %v294
    %v296 = vpop.f32.mrb[0].mxu0
    %297 = vmatprep.mubr.f32.mxu0 0.0
    %298 = vmatmul.mubr.f32.gmra.mrb[0].mxu0 %v222
    %v299 = vpop.f32.mrb[0].mxu0
    %v300 = vadd.f32 0.0, %v299
    %v301 = vpop.f32.mrb[0].mxu0
    %302 = vdwg.mxu0
    %v304 = vsel %vm219, %v201, 0
    %v307 = vsel %vm219, %v202, 0
    %v310 = vsel %vm224, %v162, 0
    %312 = vmatprep.subr.mxu0 0.0
    %313 = vmatpush1.msra.mxu0 %v161
    %314 = vmatprep.subr.mxu0 0.0
    %315 = vmatpush1.msra.mxu0 %v310
    %316 = vmatprep.subr.mxu0 0.0
    %317 = vmatpush1.msra.mxu0 0.0
    %318 = vmatprep.subr.mxu0 0.0
    %319 = vmatpush1.msra.mxu0 0.0
    %320 = vmatprep.subr.mxu0 0.0
    %321 = vmatpush1.msra.mxu0 0.0
    %322 = vmatprep.subr.mxu0 0.0
    %323 = vmatpush1.msra.mxu0 0.0
    %324 = vmatprep.subr.mxu0 0.0
    %325 = vmatpush1.msra.mxu0 0.0
    %326 = vmatprep.subr.mxu0 0.0
    %327 = vmatpush1.msra.mxu0 0.0
    %328 = vmatprep.subr.mxu0 0.0
    %329 = vmatpush1.msra.mxu0 0.0
    %330 = vmatprep.subr.mxu0 0.0
    %331 = vmatpush1.msra.mxu0 0.0
    %332 = vmatprep.subr.mxu0 0.0
    %333 = vmatpush1.msra.mxu0 0.0
    %334 = vmatprep.subr.mxu0 0.0
    %335 = vmatpush1.msra.mxu0 0.0
    %336 = vmatprep.subr.mxu0 0.0
    %337 = vmatpush1.msra.mxu0 0.0
    %338 = vmatprep.subr.mxu0 0.0
    %339 = vmatpush1.msra.mxu0 0.0
    %340 = vmatprep.subr.mxu0 0.0
    %341 = vmatpush1.msra.mxu0 0.0
    %342 = vmatprep.subr.mxu0 0.0
    %343 = vmatpush1.msra.mxu0 0.0
    %344 = vmatprep.subr.mxu0 0.0
    %345 = vmatpush1.msra.mxu0 0.0
    %346 = vmatprep.subr.mxu0 0.0
    %347 = vmatpush1.msra.mxu0 0.0
    %348 = vmatprep.subr.mxu0 0.0
    %349 = vmatpush1.msra.mxu0 0.0
    %350 = vmatprep.subr.mxu0 0.0
    %351 = vmatpush1.msra.mxu0 0.0
    %352 = vmatprep.subr.mxu0 0.0
    %353 = vmatpush1.msra.mxu0 0.0
    %354 = vmatprep.subr.mxu0 0.0
    %355 = vmatpush1.msra.mxu0 0.0
    %356 = vmatprep.subr.mxu0 0.0
    %357 = vmatpush1.msra.mxu0 0.0
    %358 = vmatprep.subr.mxu0 0.0
    %359 = vmatpush1.msra.mxu0 0.0
    %360 = vmatprep.subr.mxu0 0.0
    %361 = vmatpush1.msra.mxu0 0.0
    %362 = vmatprep.subr.mxu0 0.0
    %363 = vmatpush1.msra.mxu0 0.0
    %364 = vmatprep.subr.mxu0 0.0
    %365 = vmatpush1.msra.mxu0 0.0
    %366 = vmatprep.subr.mxu0 0.0
    %367 = vmatpush1.msra.mxu0 0.0
    %368 = vmatprep.subr.mxu0 0.0
    %369 = vmatpush1.msra.mxu0 0.0
    %370 = vmatprep.subr.mxu0 0.0
    %371 = vmatpush1.msra.mxu0 0.0
    %372 = vmatprep.subr.mxu0 0.0
    %373 = vmatpush1.msra.mxu0 0.0
    %374 = vmatprep.subr.mxu0 0.0
    %375 = vmatpush1.msra.mxu0 0.0
    %376 = vmatprep.mubr.f32.mxu0 0.0
    %377 = vmatmul.mubr.f32.gmra.mrb[0].mxu0 %v304
    %v378 = vpop.f32.mrb[0].mxu0
    %v379 = vadd.f32 %v295, %v378
    %v380 = vpop.f32.mrb[0].mxu0
    %381 = vmatprep.mubr.f32.mxu0 0.0
    %382 = vmatmul.mubr.f32.gmra.mrb[0].mxu0 %v307
    %v383 = vpop.f32.mrb[0].mxu0
    %v384 = vadd.f32 %v300, %v383
    %v385 = vpop.f32.mrb[0].mxu0
    %386 = vdwg.mxu0
    %v388 = vsel %vm219, %v217, 0
    %v391 = vsel %vm219, %v218, 0
    %v394 = vsel %vm224, %v166, 0
    %396 = vmatprep.subr.mxu0 0.0
    %397 = vmatpush1.msra.mxu0 %v165
    %398 = vmatprep.subr.mxu0 0.0
    %399 = vmatpush1.msra.mxu0 %v394
    %400 = vmatprep.subr.mxu0 0.0
    %401 = vmatpush1.msra.mxu0 0.0
    %402 = vmatprep.subr.mxu0 0.0
    %403 = vmatpush1.msra.mxu0 0.0
    %404 = vmatprep.subr.mxu0 0.0
    %405 = vmatpush1.msra.mxu0 0.0
    %406 = vmatprep.subr.mxu0 0.0
    %407 = vmatpush1.msra.mxu0 0.0
    %408 = vmatprep.subr.mxu0 0.0
    %409 = vmatpush1.msra.mxu0 0.0
    %410 = vmatprep.subr.mxu0 0.0
    %411 = vmatpush1.msra.mxu0 0.0
    %412 = vmatprep.subr.mxu0 0.0
    %413 = vmatpush1.msra.mxu0 0.0
    %414 = vmatprep.subr.mxu0 0.0
    %415 = vmatpush1.msra.mxu0 0.0
    %416 = vmatprep.subr.mxu0 0.0
    %417 = vmatpush1.msra.mxu0 0.0
    %418 = vmatprep.subr.mxu0 0.0
    %419 = vmatpush1.msra.mxu0 0.0
    %420 = vmatprep.subr.mxu0 0.0
    %421 = vmatpush1.msra.mxu0 0.0
    %422 = vmatprep.subr.mxu0 0.0
    %423 = vmatpush1.msra.mxu0 0.0
    %424 = vmatprep.subr.mxu0 0.0
    %425 = vmatpush1.msra.mxu0 0.0
    %426 = vmatprep.subr.mxu0 0.0
    %427 = vmatpush1.msra.mxu0 0.0
    %428 = vmatprep.subr.mxu0 0.0
    %429 = vmatpush1.msra.mxu0 0.0
    %430 = vmatprep.subr.mxu0 0.0
    %431 = vmatpush1.msra.mxu0 0.0
    %432 = vmatprep.subr.mxu0 0.0
    %433 = vmatpush1.msra.mxu0 0.0
    %434 = vmatprep.subr.mxu0 0.0
    %435 = vmatpush1.msra.mxu0 0.0
    %436 = vmatprep.subr.mxu0 0.0
    %437 = vmatpush1.msra.mxu0 0.0
    %438 = vmatprep.subr.mxu0 0.0
    %439 = vmatpush1.msra.mxu0 0.0
    %440 = vmatprep.subr.mxu0 0.0
    %441 = vmatpush1.msra.mxu0 0.0
    %442 = vmatprep.subr.mxu0 0.0
    %443 = vmatpush1.msra.mxu0 0.0
    %444 = vmatprep.subr.mxu0 0.0
    %445 = vmatpush1.msra.mxu0 0.0
    %446 = vmatprep.subr.mxu0 0.0
    %447 = vmatpush1.msra.mxu0 0.0
    %448 = vmatprep.subr.mxu0 0.0
    %449 = vmatpush1.msra.mxu0 0.0
    %450 = vmatprep.subr.mxu0 0.0
    %451 = vmatpush1.msra.mxu0 0.0
    %452 = vmatprep.subr.mxu0 0.0
    %453 = vmatpush1.msra.mxu0 0.0
    %454 = vmatprep.subr.mxu0 0.0
    %455 = vmatpush1.msra.mxu0 0.0
    %456 = vmatprep.subr.mxu0 0.0
    %457 = vmatpush1.msra.mxu0 0.0
    %458 = vmatprep.subr.mxu0 0.0
    %459 = vmatpush1.msra.mxu0 0.0
    %460 = vmatprep.mubr.f32.mxu0 0.0
    %461 = vmatmul.mubr.f32.gmra.mrb[0].mxu0 %v388
    %v462 = vpop.f32.mrb[0].mxu0
    %v463 = vadd.f32 0.0, %v462
    %v464 = vpop.f32.mrb[0].mxu0
    %465 = vmatprep.mubr.f32.mxu0 0.0
    %466 = vmatmul.mubr.f32.gmra.mrb[0].mxu0 %v391
    %v467 = vpop.f32.mrb[0].mxu0
    %v468 = vadd.f32 0.0, %v467
    %v469 = vpop.f32.mrb[0].mxu0
    %470 = vdwg.mxu0
    %v471 = vadd.f32 %v379, %v463
    %v472 = vadd.f32 %v384, %v468
    %v473 = vld [vmem:[#allocation6 + $0xc0] sm:$0x1]
    %v474 = vlaneseq
    %v475 = vshrl.u32 %v474, 7
    %v476 = vsub.s32 0, %v475
    %v477 = vrot.slane %v473, %v476
    %v478 = vadd.f32 %v471, %v477
    %v479 = vadd.f32 %v472, %v477
    %v480 = vmax.f32 %v478, 0.0
    %v481 = vmax.f32 %v479, 0.0
    %v482 = vld [vmem:[#allocation6 + $0xc1] sm:$0x1]
    %v483 = vlaneseq
    %v484 = vshrl.u32 %v483, 7
    %v485 = vsub.s32 0, %v484
    %v486 = vrot.slane %v482, %v485
    %v488 = vsel %vm224, %v168, 0
    %490 = vmatprep.subr.mxu0 0.0
    %491 = vmatpush1.msra.mxu0 %v167
    %492 = vmatprep.subr.mxu0 0.0
    %493 = vmatpush1.msra.mxu0 %v488
    %494 = vmatprep.subr.mxu0 0.0
    %495 = vmatpush1.msra.mxu0 0.0
    %496 = vmatprep.subr.mxu0 0.0
    %497 = vmatpush1.msra.mxu0 0.0
    %498 = vmatprep.subr.mxu0 0.0
    %499 = vmatpush1.msra.mxu0 0.0
    %500 = vmatprep.subr.mxu0 0.0
    %501 = vmatpush1.msra.mxu0 0.0
    %502 = vmatprep.subr.mxu0 0.0
    %503 = vmatpush1.msra.mxu0 0.0
    %504 = vmatprep.subr.mxu0 0.0
    %505 = vmatpush1.msra.mxu0 0.0
    %506 = vmatprep.subr.mxu0 0.0
    %507 = vmatpush1.msra.mxu0 0.0
    %508 = vmatprep.subr.mxu0 0.0
    %509 = vmatpush1.msra.mxu0 0.0
    %510 = vmatprep.subr.mxu0 0.0
    %511 = vmatpush1.msra.mxu0 0.0
    %512 = vmatprep.subr.mxu0 0.0
    %513 = vmatpush1.msra.mxu0 0.0
    %514 = vmatprep.subr.mxu0 0.0
    %515 = vmatpush1.msra.mxu0 0.0
    %516 = vmatprep.subr.mxu0 0.0
    %517 = vmatpush1.msra.mxu0 0.0
    %518 = vmatprep.subr.mxu0 0.0
    %519 = vmatpush1.msra.mxu0 0.0
    %520 = vmatprep.subr.mxu0 0.0
    %521 = vmatpush1.msra.mxu0 0.0
    %522 = vmatprep.subr.mxu0 0.0
    %523 = vmatpush1.msra.mxu0 0.0
    %524 = vmatprep.subr.mxu0 0.0
    %525 = vmatpush1.msra.mxu0 0.0
    %526 = vmatprep.subr.mxu0 0.0
    %527 = vmatpush1.msra.mxu0 0.0
    %528 = vmatprep.subr.mxu0 0.0
    %529 = vmatpush1.msra.mxu0 0.0
    %530 = vmatprep.subr.mxu0 0.0
    %531 = vmatpush1.msra.mxu0 0.0
    %532 = vmatprep.subr.mxu0 0.0
    %533 = vmatpush1.msra.mxu0 0.0
    %534 = vmatprep.subr.mxu0 0.0
    %535 = vmatpush1.msra.mxu0 0.0
    %536 = vmatprep.subr.mxu0 0.0
    %537 = vmatpush1.msra.mxu0 0.0
    %538 = vmatprep.subr.mxu0 0.0
    %539 = vmatpush1.msra.mxu0 0.0
    %540 = vmatprep.subr.mxu0 0.0
    %541 = vmatpush1.msra.mxu0 0.0
    %542 = vmatprep.subr.mxu0 0.0
    %543 = vmatpush1.msra.mxu0 0.0
    %544 = vmatprep.subr.mxu0 0.0
    %545 = vmatpush1.msra.mxu0 0.0
    %546 = vmatprep.subr.mxu0 0.0
    %547 = vmatpush1.msra.mxu0 0.0
    %548 = vmatprep.subr.mxu0 0.0
    %549 = vmatpush1.msra.mxu0 0.0
    %550 = vmatprep.subr.mxu0 0.0
    %551 = vmatpush1.msra.mxu0 0.0
    %552 = vmatprep.subr.mxu0 0.0
    %553 = vmatpush1.msra.mxu0 0.0
    %554 = vmatprep.mubr.f32.mxu0 0.0
    %555 = vmatmul.mubr.f32.gmra.mrb[0].mxu0 %v220
    %v556 = vpop.f32.mrb[0].mxu0
    %v557 = vadd.f32 %v486, %v556
    %v558 = vpop.f32.mrb[0].mxu0
    %559 = vmatprep.mubr.f32.mxu0 0.0
    %560 = vmatmul.mubr.f32.gmra.mrb[0].mxu0 %v222
    %v561 = vpop.f32.mrb[0].mxu0
    %v562 = vadd.f32 %v486, %v561
    %v563 = vpop.f32.mrb[0].mxu0
    %564 = vdwg.mxu0
    %v565 = vmul.f32 %v557, %v110
    %v566 = vmul.f32 %v562, %v111
    %v567 = vmul.f32 %v557, %v112
    %v568 = vmul.f32 %v562, %v113
    %v569 = vmul.f32 %v557, %v114
    %v570 = vmul.f32 %v562, %v115
    %v571 = vmul.f32 %v557, %v116
    %v572 = vmul.f32 %v562, %v117
    %v573 = vmul.f32 %v557, %v118
    %v574 = vmul.f32 %v562, %v119
    %v575 = vmul.f32 %v557, %v120
    %v576 = vmul.f32 %v562, %v121
    %579 = vrot.lane.b32.xlu0 %v557, 116
    %v580 = vpop.permute.xlu0 %579
    %581 = vrot.lane.b32.xlu0 %v562, 116
    %v582 = vpop.permute.xlu0 %581
    %v584 = vsel %vm219, %v565, 0
    %v587 = vsel %vm219, %v566, 0
    %v590 = vsel %vm219, %v567, 0
    %v593 = vsel %vm219, %v568, 0
    %v596 = vsel %vm219, %v569, 0
    %v599 = vsel %vm219, %v570, 0
    %v602 = vsel %vm219, %v571, 0
    %v605 = vsel %vm219, %v572, 0
    %v608 = vsel %vm219, %v573, 0
    %v611 = vsel %vm219, %v574, 0
    %v614 = vsel %vm219, %v575, 0
    %v617 = vsel %vm219, %v576, 0
    %v619 = vsel %vm219, %v580, 0
    %v621 = vsel %vm219, %v582, 0
    %623 = vmatprep.subr.mxu0 0.0
    %624 = vmatpush1.xpose.msra.mxu0 %v619
    %625 = vmatprep.subr.mxu0 0.0
    %626 = vmatpush1.xpose.msra.mxu0 %v621
    %627 = vmatprep.subr.mxu0 0.0
    %628 = vmatpush1.xpose.msra.mxu0 0.0
    %629 = vmatprep.subr.mxu0 0.0
    %630 = vmatpush1.xpose.msra.mxu0 0.0
    %631 = vmatprep.subr.mxu0 0.0
    %632 = vmatpush1.xpose.msra.mxu0 0.0
    %633 = vmatprep.subr.mxu0 0.0
    %634 = vmatpush1.xpose.msra.mxu0 0.0
    %635 = vmatprep.subr.mxu0 0.0
    %636 = vmatpush1.xpose.msra.mxu0 0.0
    %637 = vmatprep.subr.mxu0 0.0
    %638 = vmatpush1.xpose.msra.mxu0 0.0
    %639 = vmatprep.subr.mxu0 0.0
    %640 = vmatpush1.xpose.msra.mxu0 0.0
    %641 = vmatprep.subr.mxu0 0.0
    %642 = vmatpush1.xpose.msra.mxu0 0.0
    %643 = vmatprep.subr.mxu0 0.0
    %644 = vmatpush1.xpose.msra.mxu0 0.0
    %645 = vmatprep.subr.mxu0 0.0
    %646 = vmatpush1.xpose.msra.mxu0 0.0
    %647 = vmatprep.subr.mxu0 0.0
    %648 = vmatpush1.xpose.msra.mxu0 0.0
    %649 = vmatprep.subr.mxu0 0.0
    %650 = vmatpush1.xpose.msra.mxu0 0.0
    %651 = vmatprep.subr.mxu0 0.0
    %652 = vmatpush1.xpose.msra.mxu0 0.0
    %653 = vmatprep.subr.mxu0 0.0
    %654 = vmatpush1.xpose.msra.mxu0 0.0
    %655 = vmatprep.subr.mxu0 0.0
    %656 = vmatpush1.xpose.msra.mxu0 0.0
    %657 = vmatprep.subr.mxu0 0.0
    %658 = vmatpush1.xpose.msra.mxu0 0.0
    %659 = vmatprep.subr.mxu0 0.0
    %660 = vmatpush1.xpose.msra.mxu0 0.0
    %661 = vmatprep.subr.mxu0 0.0
    %662 = vmatpush1.xpose.msra.mxu0 0.0
    %663 = vmatprep.subr.mxu0 0.0
    %664 = vmatpush1.xpose.msra.mxu0 0.0
    %665 = vmatprep.subr.mxu0 0.0
    %666 = vmatpush1.xpose.msra.mxu0 0.0
    %667 = vmatprep.subr.mxu0 0.0
    %668 = vmatpush1.xpose.msra.mxu0 0.0
    %669 = vmatprep.subr.mxu0 0.0
    %670 = vmatpush1.xpose.msra.mxu0 0.0
    %671 = vmatprep.subr.mxu0 0.0
    %672 = vmatpush1.xpose.msra.mxu0 0.0
    %673 = vmatprep.subr.mxu0 0.0
    %674 = vmatpush1.xpose.msra.mxu0 0.0
    %675 = vmatprep.subr.mxu0 0.0
    %676 = vmatpush1.xpose.msra.mxu0 0.0
    %677 = vmatprep.subr.mxu0 0.0
    %678 = vmatpush1.xpose.msra.mxu0 0.0
    %679 = vmatprep.subr.mxu0 0.0
    %680 = vmatpush1.xpose.msra.mxu0 0.0
    %681 = vmatprep.subr.mxu0 0.0
    %682 = vmatpush1.xpose.msra.mxu0 0.0
    %683 = vmatprep.subr.mxu0 0.0
    %684 = vmatpush1.xpose.msra.mxu0 0.0
    %685 = vmatprep.subr.mxu0 0.0
    %686 = vmatpush1.xpose.msra.mxu0 0.0
    %687 = vmatprep.mubr.f32.mxu0 0.0
    %688 = vmatmul.mubr.f32.gmra.mrb[0].mxu0 %v584
    %v689 = vpop.f32.mrb[0].mxu0
    %v690 = vadd.f32 0.0, %v689
    %v691 = vpop.f32.mrb[0].mxu0
    %692 = vmatprep.mubr.f32.mxu0 0.0
    %693 = vmatmul.mubr.f32.gmra.mrb[0].mxu0 %v587
    %v694 = vpop.f32.mrb[0].mxu0
    %v695 = vadd.f32 0.0, %v694
    %v696 = vpop.f32.mrb[0].mxu0
    %697 = vmatprep.mubr.f32.mxu0 0.0
    %698 = vmatmul.mubr.f32.gmra.mrb[0].mxu0 %v590
    %v699 = vpop.f32.mrb[0].mxu0
    %v700 = vadd.f32 0.0, %v699
    %v701 = vpop.f32.mrb[0].mxu0
    %702 = vmatprep.mubr.f32.mxu0 0.0
    %703 = vmatmul.mubr.f32.gmra.mrb[0].mxu0 %v593
    %v704 = vpop.f32.mrb[0].mxu0
    %v705 = vadd.f32 0.0, %v704
    %v706 = vpop.f32.mrb[0].mxu0
    %707 = vmatprep.mubr.f32.mxu0 0.0
    %708 = vmatmul.mubr.f32.gmra.mrb[0].mxu0 %v596
    %v709 = vpop.f32.mrb[0].mxu0
    %v710 = vadd.f32 0.0, %v709
    %v711 = vpop.f32.mrb[0].mxu0
    %712 = vmatprep.mubr.f32.mxu0 0.0
    %713 = vmatmul.mubr.f32.gmra.mrb[0].mxu0 %v599
    %v714 = vpop.f32.mrb[0].mxu0
    %v715 = vadd.f32 0.0, %v714
    %v716 = vpop.f32.mrb[0].mxu0
    %717 = vmatprep.mubr.f32.mxu0 0.0
    %718 = vmatmul.mubr.f32.gmra.mrb[0].mxu0 %v602
    %v719 = vpop.f32.mrb[0].mxu0
    %v720 = vadd.f32 0.0, %v719
    %v721 = vpop.f32.mrb[0].mxu0
    %722 = vmatprep.mubr.f32.mxu0 0.0
    %723 = vmatmul.mubr.f32.gmra.mrb[0].mxu0 %v605
    %v724 = vpop.f32.mrb[0].mxu0
    %v725 = vadd.f32 0.0, %v724
    %v726 = vpop.f32.mrb[0].mxu0
    %727 = vmatprep.mubr.f32.mxu0 0.0
    %728 = vmatmul.mubr.f32.gmra.mrb[0].mxu0 %v608
    %v729 = vpop.f32.mrb[0].mxu0
    %v730 = vadd.f32 0.0, %v729
    %v731 = vpop.f32.mrb[0].mxu0
    %732 = vmatprep.mubr.f32.mxu0 0.0
    %733 = vmatmul.mubr.f32.gmra.mrb[0].mxu0 %v611
    %v734 = vpop.f32.mrb[0].mxu0
    %v735 = vadd.f32 0.0, %v734
    %v736 = vpop.f32.mrb[0].mxu0
    %737 = vmatprep.mubr.f32.mxu0 0.0
    %738 = vmatmul.mubr.f32.gmra.mrb[0].mxu0 %v614
    %v739 = vpop.f32.mrb[0].mxu0
    %v740 = vadd.f32 0.0, %v739
    %v741 = vpop.f32.mrb[0].mxu0
    %742 = vmatprep.mubr.f32.mxu0 0.0
    %743 = vmatmul.mubr.f32.gmra.mrb[0].mxu0 %v617
    %v744 = vpop.f32.mrb[0].mxu0
    %v745 = vadd.f32 0.0, %v744
    %v746 = vpop.f32.mrb[0].mxu0
    %747 = vdwg.mxu0
    %v748 = vmul.f32 %v690, 0.70710677
    %v749 = vmul.f32 %v695, 0.70710677
    %v750 = vmul.f32 %v700, 0.70710677
    %v751 = vmul.f32 %v705, 0.70710677
    %v752 = vmul.f32 %v710, 0.70710677
    %v753 = vmul.f32 %v715, 0.70710677
    %v754 = vmul.f32 %v720, 0.70710677
    %v755 = vmul.f32 %v725, 0.70710677
    %v756 = vmul.f32 %v730, 0.70710677
    %v757 = vmul.f32 %v735, 0.70710677
    %v758 = vmul.f32 %v740, 0.70710677
    %v759 = vmul.f32 %v745, 0.70710677
    %v760 = vsel %vm147, %v748, -1e+30
    %v761 = vsel %vm148, %v749, -1e+30
    %v762 = vsel %vm149, %v750, -1e+30
    %v763 = vsel %vm150, %v751, -1e+30
    %v764 = vsel %vm151, %v752, -1e+30
    %v765 = vsel %vm152, %v753, -1e+30
    %v766 = vsel %vm153, %v754, -1e+30
    %v767 = vsel %vm154, %v755, -1e+30
    %v768 = vsel %vm155, %v756, -1e+30
    %v769 = vsel %vm156, %v757, -1e+30
    %v770 = vsel %vm157, %v758, -1e+30
    %v771 = vsel %vm158, %v759, -1e+30
    %vm772 = vcmask 130048
    %v773 = vsel %vm772, %v760, -inf
    %774 = vmax.xlane.f32.xlu0 %v773
    %v775 = vpop.xlane.xlu0 %774
    %v776 = vsel %vm772, %v761, -inf
    %777 = vmax.xlane.f32.xlu0 %v776
    %v778 = vpop.xlane.xlu0 %777
    %v779 = vsel %vm772, %v762, -inf
    %780 = vmax.xlane.f32.xlu0 %v779
    %v781 = vpop.xlane.xlu0 %780
    %v782 = vsel %vm772, %v763, -inf
    %783 = vmax.xlane.f32.xlu0 %v782
    %v784 = vpop.xlane.xlu0 %783
    %v785 = vsel %vm772, %v764, -inf
    %786 = vmax.xlane.f32.xlu0 %v785
    %v787 = vpop.xlane.xlu0 %786
    %v788 = vsel %vm772, %v765, -inf
    %789 = vmax.xlane.f32.xlu0 %v788
    %v790 = vpop.xlane.xlu0 %789
    %v791 = vsel %vm772, %v766, -inf
    %792 = vmax.xlane.f32.xlu0 %v791
    %v793 = vpop.xlane.xlu0 %792
    %v794 = vsel %vm772, %v767, -inf
    %795 = vmax.xlane.f32.xlu0 %v794
    %v796 = vpop.xlane.xlu0 %795
    %v797 = vsel %vm772, %v768, -inf
    %798 = vmax.xlane.f32.xlu0 %v797
    %v799 = vpop.xlane.xlu0 %798
    %v800 = vsel %vm772, %v769, -inf
    %801 = vmax.xlane.f32.xlu0 %v800
    %v802 = vpop.xlane.xlu0 %801
    %v803 = vsel %vm772, %v770, -inf
    %804 = vmax.xlane.f32.xlu0 %v803
    %v805 = vpop.xlane.xlu0 %804
    %v806 = vsel %vm772, %v771, -inf
    %807 = vmax.xlane.f32.xlu0 %v806
    %v808 = vpop.xlane.xlu0 %807
    %v809 = vsub.f32 %v760, %v775
    %v810 = vsub.f32 %v761, %v778
    %v811 = vsub.f32 %v762, %v781
    %v812 = vsub.f32 %v763, %v784
    %v813 = vsub.f32 %v764, %v787
    %v814 = vsub.f32 %v765, %v790
    %v815 = vsub.f32 %v766, %v793
    %v816 = vsub.f32 %v767, %v796
    %v817 = vsub.f32 %v768, %v799
    %v818 = vsub.f32 %v769, %v802
    %v819 = vsub.f32 %v770, %v805
    %v820 = vsub.f32 %v771, %v808
    %v821 = vmul.f32 %v809, 1.442695
    %v822 = vpow.pop %v821
    %v823 = vmul.f32 %v810, 1.442695
    %v824 = vpow.pop %v823
    %v825 = vmul.f32 %v811, 1.442695
    %v826 = vpow.pop %v825
    %v827 = vmul.f32 %v812, 1.442695
    %v828 = vpow.pop %v827
    %v829 = vmul.f32 %v813, 1.442695
    %v830 = vpow.pop %v829
    %v831 = vmul.f32 %v814, 1.442695
    %v832 = vpow.pop %v831
    %v833 = vmul.f32 %v815, 1.442695
    %v834 = vpow.pop %v833
    %v835 = vmul.f32 %v816, 1.442695
    %v836 = vpow.pop %v835
    %v837 = vmul.f32 %v817, 1.442695
    %v838 = vpow.pop %v837
    %v839 = vmul.f32 %v818, 1.442695
    %v840 = vpow.pop %v839
    %v841 = vmul.f32 %v819, 1.442695
    %v842 = vpow.pop %v841
    %v843 = vmul.f32 %v820, 1.442695
    %v844 = vpow.pop %v843
    %v845 = vsel %vm772, %v822, 0.0
    %846 = vadd.xlane.f32.xlu0 %v845
    %v847 = vpop.xlane.xlu0 %846
    %v848 = vsel %vm772, %v824, 0.0
    %849 = vadd.xlane.f32.xlu0 %v848
    %v850 = vpop.xlane.xlu0 %849
    %v851 = vsel %vm772, %v826, 0.0
    %852 = vadd.xlane.f32.xlu0 %v851
    %v853 = vpop.xlane.xlu0 %852
    %v854 = vsel %vm772, %v828, 0.0
    %855 = vadd.xlane.f32.xlu0 %v854
    %v856 = vpop.xlane.xlu0 %855
    %v857 = vsel %vm772, %v830, 0.0
    %858 = vadd.xlane.f32.xlu0 %v857
    %v859 = vpop.xlane.xlu0 %858
    %v860 = vsel %vm772, %v832, 0.0
    %861 = vadd.xlane.f32.xlu0 %v860
    %v862 = vpop.xlane.xlu0 %861
    %v863 = vsel %vm772, %v834, 0.0
    %864 = vadd.xlane.f32.xlu0 %v863
    %v865 = vpop.xlane.xlu0 %864
    %v866 = vsel %vm772, %v836, 0.0
    %867 = vadd.xlane.f32.xlu0 %v866
    %v868 = vpop.xlane.xlu0 %867
    %v869 = vsel %vm772, %v838, 0.0
    %870 = vadd.xlane.f32.xlu0 %v869
    %v871 = vpop.xlane.xlu0 %870
    %v872 = vsel %vm772, %v840, 0.0
    %873 = vadd.xlane.f32.xlu0 %v872
    %v874 = vpop.xlane.xlu0 %873
    %v875 = vsel %vm772, %v842, 0.0
    %876 = vadd.xlane.f32.xlu0 %v875
    %v877 = vpop.xlane.xlu0 %876
    %v878 = vsel %vm772, %v844, 0.0
    %879 = vadd.xlane.f32.xlu0 %v878
    %v880 = vpop.xlane.xlu0 %879
    %v881 = vrcp.pop %v847
    %v882 = vrcp.pop %v850
    %v883 = vrcp.pop %v853
    %v884 = vrcp.pop %v856
    %v885 = vrcp.pop %v859
    %v886 = vrcp.pop %v862
    %v887 = vrcp.pop %v865
    %v888 = vrcp.pop %v868
    %v889 = vrcp.pop %v871
    %v890 = vrcp.pop %v874
    %v891 = vrcp.pop %v877
    %v892 = vrcp.pop %v880
    %v893 = vmul.f32 %v822, %v881
    %v894 = vmul.f32 %v824, %v882
    %v895 = vmul.f32 %v826, %v883
    %v896 = vmul.f32 %v828, %v884
    %v897 = vmul.f32 %v830, %v885
    %v898 = vmul.f32 %v832, %v886
    %v899 = vmul.f32 %v834, %v887
    %v900 = vmul.f32 %v836, %v888
    %v901 = vmul.f32 %v838, %v889
    %v902 = vmul.f32 %v840, %v890
    %v903 = vmul.f32 %v842, %v891
    %v904 = vmul.f32 %v844, %v892
    %905 = vrot.lane.b32.xlu0 %v557, 104
    %v906 = vpop.permute.xlu0 %905
    %907 = vrot.lane.b32.xlu0 %v562, 104
    %v908 = vpop.permute.xlu0 %907
    %v912 = vsel %vm772, %v893, 0
    %v915 = vsel %vm772, %v894, 0
    %v918 = vsel %vm772, %v895, 0
    %v921 = vsel %vm772, %v896, 0
    %v924 = vsel %vm772, %v897, 0
    %v927 = vsel %vm772, %v898, 0
    %v930 = vsel %vm772, %v899, 0
    %v933 = vsel %vm772, %v900, 0
    %v936 = vsel %vm772, %v901, 0
    %v939 = vsel %vm772, %v902, 0
    %v942 = vsel %vm772, %v903, 0
    %v945 = vsel %vm772, %v904, 0
    %947 = vmatprep.subr.mxu0 0.0
    %948 = vmatpush1.msra.mxu0 %v906
    %949 = vmatprep.subr.mxu0 0.0
    %950 = vmatpush1.msra.mxu0 %v908
    %951 = vmatprep.subr.mxu0 0.0
    %952 = vmatpush1.msra.mxu0 0.0
    %953 = vmatprep.subr.mxu0 0.0
    %954 = vmatpush1.msra.mxu0 0.0
    %955 = vmatprep.subr.mxu0 0.0
    %956 = vmatpush1.msra.mxu0 0.0
    %957 = vmatprep.subr.mxu0 0.0
    %958 = vmatpush1.msra.mxu0 0.0
    %959 = vmatprep.subr.mxu0 0.0
    %960 = vmatpush1.msra.mxu0 0.0
    %961 = vmatprep.subr.mxu0 0.0
    %962 = vmatpush1.msra.mxu0 0.0
    %963 = vmatprep.subr.mxu0 0.0
    %964 = vmatpush1.msra.mxu0 0.0
    %965 = vmatprep.subr.mxu0 0.0
    %966 = vmatpush1.msra.mxu0 0.0
    %967 = vmatprep.subr.mxu0 0.0
    %968 = vmatpush1.msra.mxu0 0.0
    %969 = vmatprep.subr.mxu0 0.0
    %970 = vmatpush1.msra.mxu0 0.0
    %971 = vmatprep.subr.mxu0 0.0
    %972 = vmatpush1.msra.mxu0 0.0
    %973 = vmatprep.subr.mxu0 0.0
    %974 = vmatpush1.msra.mxu0 0.0
    %975 = vmatprep.subr.mxu0 0.0
    %976 = vmatpush1.msra.mxu0 0.0
    %977 = vmatprep.subr.mxu0 0.0
    %978 = vmatpush1.msra.mxu0 0.0
    %979 = vmatprep.subr.mxu0 0.0
    %980 = vmatpush1.msra.mxu0 0.0
    %981 = vmatprep.subr.mxu0 0.0
    %982 = vmatpush1.msra.mxu0 0.0
    %983 = vmatprep.subr.mxu0 0.0
    %984 = vmatpush1.msra.mxu0 0.0
    %985 = vmatprep.subr.mxu0 0.0
    %986 = vmatpush1.msra.mxu0 0.0
    %987 = vmatprep.subr.mxu0 0.0
    %988 = vmatpush1.msra.mxu0 0.0
    %989 = vmatprep.subr.mxu0 0.0
    %990 = vmatpush1.msra.mxu0 0.0
    %991 = vmatprep.subr.mxu0 0.0
    %992 = vmatpush1.msra.mxu0 0.0
    %993 = vmatprep.subr.mxu0 0.0
    %994 = vmatpush1.msra.mxu0 0.0
    %995 = vmatprep.subr.mxu0 0.0
    %996 = vmatpush1.msra.mxu0 0.0
    %997 = vmatprep.subr.mxu0 0.0
    %998 = vmatpush1.msra.mxu0 0.0
    %999 = vmatprep.subr.mxu0 0.0
    %1000 = vmatpush1.msra.mxu0 0.0
    %1001 = vmatprep.subr.mxu0 0.0
    %1002 = vmatpush1.msra.mxu0 0.0
    %1003 = vmatprep.subr.mxu0 0.0
    %1004 = vmatpush1.msra.mxu0 0.0
    %1005 = vmatprep.subr.mxu0 0.0
    %1006 = vmatpush1.msra.mxu0 0.0
    %1007 = vmatprep.subr.mxu0 0.0
    %1008 = vmatpush1.msra.mxu0 0.0
    %1009 = vmatprep.subr.mxu0 0.0
    %1010 = vmatpush1.msra.mxu0 0.0
    %1011 = vmatprep.mubr.f32.mxu0 0.0
    %1012 = vmatmul.mubr.f32.gmra.mrb[0].mxu0 %v912
    %v1013 = vpop.f32.mrb[0].mxu0
    %v1014 = vadd.f32 0.0, %v1013
    %v1015 = vpop.f32.mrb[0].mxu0
    %1016 = vmatprep.mubr.f32.mxu0 0.0
    %1017 = vmatmul.mubr.f32.gmra.mrb[0].mxu0 %v915
    %v1018 = vpop.f32.mrb[0].mxu0
    %v1019 = vadd.f32 0.0, %v1018
    %v1020 = vpop.f32.mrb[0].mxu0
    %1021 = vmatprep.mubr.f32.mxu0 0.0
    %1022 = vmatmul.mubr.f32.gmra.mrb[0].mxu0 %v918
    %v1023 = vpop.f32.mrb[0].mxu0
    %v1024 = vadd.f32 0.0, %v1023
    %v1025 = vpop.f32.mrb[0].mxu0
    %1026 = vmatprep.mubr.f32.mxu0 0.0
    %1027 = vmatmul.mubr.f32.gmra.mrb[0].mxu0 %v921
    %v1028 = vpop.f32.mrb[0].mxu0
    %v1029 = vadd.f32 0.0, %v1028
    %v1030 = vpop.f32.mrb[0].mxu0
    %1031 = vmatprep.mubr.f32.mxu0 0.0
    %1032 = vmatmul.mubr.f32.gmra.mrb[0].mxu0 %v924
    %v1033 = vpop.f32.mrb[0].mxu0
    %v1034 = vadd.f32 0.0, %v1033
    %v1035 = vpop.f32.mrb[0].mxu0
    %1036 = vmatprep.mubr.f32.mxu0 0.0
    %1037 = vmatmul.mubr.f32.gmra.mrb[0].mxu0 %v927
    %v1038 = vpop.f32.mrb[0].mxu0
    %v1039 = vadd.f32 0.0, %v1038
    %v1040 = vpop.f32.mrb[0].mxu0
    %1041 = vmatprep.mubr.f32.mxu0 0.0
    %1042 = vmatmul.mubr.f32.gmra.mrb[0].mxu0 %v930
    %v1043 = vpop.f32.mrb[0].mxu0
    %v1044 = vadd.f32 0.0, %v1043
    %v1045 = vpop.f32.mrb[0].mxu0
    %1046 = vmatprep.mubr.f32.mxu0 0.0
    %1047 = vmatmul.mubr.f32.gmra.mrb[0].mxu0 %v933
    %v1048 = vpop.f32.mrb[0].mxu0
    %v1049 = vadd.f32 0.0, %v1048
    %v1050 = vpop.f32.mrb[0].mxu0
    %1051 = vmatprep.mubr.f32.mxu0 0.0
    %1052 = vmatmul.mubr.f32.gmra.mrb[0].mxu0 %v936
    %v1053 = vpop.f32.mrb[0].mxu0
    %v1054 = vadd.f32 0.0, %v1053
    %v1055 = vpop.f32.mrb[0].mxu0
    %1056 = vmatprep.mubr.f32.mxu0 0.0
    %1057 = vmatmul.mubr.f32.gmra.mrb[0].mxu0 %v939
    %v1058 = vpop.f32.mrb[0].mxu0
    %v1059 = vadd.f32 0.0, %v1058
    %v1060 = vpop.f32.mrb[0].mxu0
    %1061 = vmatprep.mubr.f32.mxu0 0.0
    %1062 = vmatmul.mubr.f32.gmra.mrb[0].mxu0 %v942
    %v1063 = vpop.f32.mrb[0].mxu0
    %v1064 = vadd.f32 0.0, %v1063
    %v1065 = vpop.f32.mrb[0].mxu0
    %1066 = vmatprep.mubr.f32.mxu0 0.0
    %1067 = vmatmul.mubr.f32.gmra.mrb[0].mxu0 %v945
    %v1068 = vpop.f32.mrb[0].mxu0
    %v1069 = vadd.f32 0.0, %v1068
    %v1070 = vpop.f32.mrb[0].mxu0
    %1071 = vdwg.mxu0
    %v1072 = vmul.f32 %v1014, %v110
    %v1073 = vmul.f32 %v1019, %v111
    %v1074 = vmul.f32 %v1024, %v112
    %v1075 = vmul.f32 %v1029, %v113
    %v1076 = vmul.f32 %v1034, %v114
    %v1077 = vmul.f32 %v1039, %v115
    %v1078 = vmul.f32 %v1044, %v116
    %v1079 = vmul.f32 %v1049, %v117
    %v1080 = vmul.f32 %v1054, %v118
    %v1081 = vmul.f32 %v1059, %v119
    %v1082 = vmul.f32 %v1064, %v120
    %v1083 = vmul.f32 %v1069, %v121
    %v1084 = vsel %vm219, %v1072, 0.0
    %v1085 = vsel %vm219, %v1074, 0.0
    %v1086 = vadd.f32 %v1084, %v1085
    %v1087 = vsel %vm219, %v1076, 0.0
    %v1088 = vadd.f32 %v1086, %v1087
    %v1089 = vsel %vm219, %v1078, 0.0
    %v1090 = vadd.f32 %v1088, %v1089
    %v1091 = vsel %vm219, %v1080, 0.0
    %v1092 = vadd.f32 %v1090, %v1091
    %v1093 = vsel %vm219, %v1082, 0.0
    %v1094 = vadd.f32 %v1092, %v1093
    %v1095 = vsel %vm219, %v1073, 0.0
    %v1096 = vsel %vm219, %v1075, 0.0
    %v1097 = vadd.f32 %v1095, %v1096
    %v1098 = vsel %vm219, %v1077, 0.0
    %v1099 = vadd.f32 %v1097, %v1098
    %v1100 = vsel %vm219, %v1079, 0.0
    %v1101 = vadd.f32 %v1099, %v1100
    %v1102 = vsel %vm219, %v1081, 0.0
    %v1103 = vadd.f32 %v1101, %v1102
    %v1104 = vsel %vm219, %v1083, 0.0
    %v1105 = vadd.f32 %v1103, %v1104
    %v1106 = vld [vmem:[#allocation6 + $0xc2] sm:$0x1]
    %v1107 = vlaneseq
    %v1108 = vshrl.u32 %v1107, 7
    %v1109 = vsub.s32 0, %v1108
    %v1110 = vrot.slane %v1106, %v1109
    %v1112 = vsel %vm219, %v1094, 0
    %v1115 = vsel %vm219, %v1105, 0
    %v1118 = vsel %vm224, %v170, 0
    %1120 = vmatprep.subr.mxu0 0.0
    %1121 = vmatpush1.msra.mxu0 %v169
    %1122 = vmatprep.subr.mxu0 0.0
    %1123 = vmatpush1.msra.mxu0 %v1118
    %1124 = vmatprep.subr.mxu0 0.0
    %1125 = vmatpush1.msra.mxu0 0.0
    %1126 = vmatprep.subr.mxu0 0.0
    %1127 = vmatpush1.msra.mxu0 0.0
    %1128 = vmatprep.subr.mxu0 0.0
    %1129 = vmatpush1.msra.mxu0 0.0
    %1130 = vmatprep.subr.mxu0 0.0
    %1131 = vmatpush1.msra.mxu0 0.0
    %1132 = vmatprep.subr.mxu0 0.0
    %1133 = vmatpush1.msra.mxu0 0.0
    %1134 = vmatprep.subr.mxu0 0.0
    %1135 = vmatpush1.msra.mxu0 0.0
    %1136 = vmatprep.subr.mxu0 0.0
    %1137 = vmatpush1.msra.mxu0 0.0
    %1138 = vmatprep.subr.mxu0 0.0
    %1139 = vmatpush1.msra.mxu0 0.0
    %1140 = vmatprep.subr.mxu0 0.0
    %1141 = vmatpush1.msra.mxu0 0.0
    %1142 = vmatprep.subr.mxu0 0.0
    %1143 = vmatpush1.msra.mxu0 0.0
    %1144 = vmatprep.subr.mxu0 0.0
    %1145 = vmatpush1.msra.mxu0 0.0
    %1146 = vmatprep.subr.mxu0 0.0
    %1147 = vmatpush1.msra.mxu0 0.0
    %1148 = vmatprep.subr.mxu0 0.0
    %1149 = vmatpush1.msra.mxu0 0.0
    %1150 = vmatprep.subr.mxu0 0.0
    %1151 = vmatpush1.msra.mxu0 0.0
    %1152 = vmatprep.subr.mxu0 0.0
    %1153 = vmatpush1.msra.mxu0 0.0
    %1154 = vmatprep.subr.mxu0 0.0
    %1155 = vmatpush1.msra.mxu0 0.0
    %1156 = vmatprep.subr.mxu0 0.0
    %1157 = vmatpush1.msra.mxu0 0.0
    %1158 = vmatprep.subr.mxu0 0.0
    %1159 = vmatpush1.msra.mxu0 0.0
    %1160 = vmatprep.subr.mxu0 0.0
    %1161 = vmatpush1.msra.mxu0 0.0
    %1162 = vmatprep.subr.mxu0 0.0
    %1163 = vmatpush1.msra.mxu0 0.0
    %1164 = vmatprep.subr.mxu0 0.0
    %1165 = vmatpush1.msra.mxu0 0.0
    %1166 = vmatprep.subr.mxu0 0.0
    %1167 = vmatpush1.msra.mxu0 0.0
    %1168 = vmatprep.subr.mxu0 0.0
    %1169 = vmatpush1.msra.mxu0 0.0
    %1170 = vmatprep.subr.mxu0 0.0
    %1171 = vmatpush1.msra.mxu0 0.0
    %1172 = vmatprep.subr.mxu0 0.0
    %1173 = vmatpush1.msra.mxu0 0.0
    %1174 = vmatprep.subr.mxu0 0.0
    %1175 = vmatpush1.msra.mxu0 0.0
    %1176 = vmatprep.subr.mxu0 0.0
    %1177 = vmatpush1.msra.mxu0 0.0
    %1178 = vmatprep.subr.mxu0 0.0
    %1179 = vmatpush1.msra.mxu0 0.0
    %1180 = vmatprep.subr.mxu0 0.0
    %1181 = vmatpush1.msra.mxu0 0.0
    %1182 = vmatprep.subr.mxu0 0.0
    %1183 = vmatpush1.msra.mxu0 0.0
    %1184 = vmatprep.mubr.f32.mxu0 0.0
    %1185 = vmatmul.mubr.f32.gmra.mrb[0].mxu0 %v1112
    %v1186 = vpop.f32.mrb[0].mxu0
    %v1187 = vadd.f32 %v1110, %v1186
    %v1188 = vpop.f32.mrb[0].mxu0
    %1189 = vmatprep.mubr.f32.mxu0 0.0
    %1190 = vmatmul.mubr.f32.gmra.mrb[0].mxu0 %v1115
    %v1191 = vpop.f32.mrb[0].mxu0
    %v1192 = vadd.f32 %v1110, %v1191
    %v1193 = vpop.f32.mrb[0].mxu0
    %1194 = vdwg.mxu0
    %v1195 = vadd.f32 %v56, %v1187
    %v1196 = vadd.f32 %v57, %v1192
    %v1197 = vld [vmem:[#allocation6 + $0xc3] sm:$0x1]
    %v1198 = vld [vmem:[#allocation6 + $0xc4] sm:$0x1]
    %v1199 = vsel %vm219, %v1195, 0.0
    %1200 = vadd.xlane.f32.xlu0 %v1199
    %v1201 = vpop.xlane.xlu0 %1200
    %v1202 = vsel %vm219, %v1196, 0.0
    %1203 = vadd.xlane.f32.xlu0 %v1202
    %v1204 = vpop.xlane.xlu0 %1203
    %v1205 = vrcp.pop 12.0
    %v1206 = vmul.f32 %v1201, %v1205
    %v1207 = vmul.f32 %v1204, %v1205
    %v1208 = vsub.f32 %v1195, %v1206
    %v1209 = vsub.f32 %v1196, %v1207
    %v1210 = vmul.f32 %v1208, %v1208
    %v1211 = vmul.f32 %v1209, %v1209
    %v1212 = vsel %vm219, %v1210, 0.0
    %1213 = vadd.xlane.f32.xlu0 %v1212
    %v1214 = vpop.xlane.xlu0 %1213
    %v1215 = vsel %vm219, %v1211, 0.0
    %1216 = vadd.xlane.f32.xlu0 %v1215
    %v1217 = vpop.xlane.xlu0 %1216
    %v1218 = vmul.f32 %v1214, %v1205
    %v1219 = vmul.f32 %v1217, %v1205
    %v1220 = vadd.f32 %v1218, 1e-05
    %v1221 = vadd.f32 %v1219, 1e-05
    %v1222 = vrsqrt.pop %v1220
    %v1223 = vrsqrt.pop %v1221
    %v1224 = vmul.f32 %v1208, %v1222
    %v1225 = vmul.f32 %v1209, %v1223
    %v1226 = vlaneseq
    %v1227 = vshrl.u32 %v1226, 7
    %v1228 = vsub.s32 0, %v1227
    %v1229 = vrot.slane %v1197, %v1228
    %v1230 = vmul.f32 %v1224, %v1229
    %v1231 = vmul.f32 %v1225, %v1229
    %v1232 = vlaneseq
    %v1233 = vshrl.u32 %v1232, 7
    %v1234 = vsub.s32 0, %v1233
    %v1235 = vrot.slane %v1198, %v1234
    %v1236 = vadd.f32 %v1230, %v1235
    %v1237 = vadd.f32 %v1231, %v1235
    %v1238 = vld [vmem:[#allocation6 + $0xc5] sm:$0x1]
    %v1239 = vlaneseq
    %v1240 = vshrl.u32 %v1239, 7
    %v1241 = vsub.s32 0, %v1240
    %v1242 = vrot.slane %v1238, %v1241
    %v1244 = vsel %vm219, %v1236, 0
    %v1247 = vsel %vm219, %v1237, 0
    %v1250 = vsel %vm224, %v172, 0
    %1252 = vmatprep.subr.mxu0 0.0
    %1253 = vmatpush1.msra.mxu0 %v171
    %1254 = vmatprep.subr.mxu0 0.0
    %1255 = vmatpush1.msra.mxu0 %v1250
    %1256 = vmatprep.subr.mxu0 0.0
    %1257 = vmatpush1.msra.mxu0 0.0
    %1258 = vmatprep.subr.mxu0 0.0
    %1259 = vmatpush1.msra.mxu0 0.0
    %1260 = vmatprep.subr.mxu0 0.0
    %1261 = vmatpush1.msra.mxu0 0.0
    %1262 = vmatprep.subr.mxu0 0.0
    %1263 = vmatpush1.msra.mxu0 0.0
    %1264 = vmatprep.subr.mxu0 0.0
    %1265 = vmatpush1.msra.mxu0 0.0
    %1266 = vmatprep.subr.mxu0 0.0
    %1267 = vmatpush1.msra.mxu0 0.0
    %1268 = vmatprep.subr.mxu0 0.0
    %1269 = vmatpush1.msra.mxu0 0.0
    %1270 = vmatprep.subr.mxu0 0.0
    %1271 = vmatpush1.msra.mxu0 0.0
    %1272 = vmatprep.subr.mxu0 0.0
    %1273 = vmatpush1.msra.mxu0 0.0
    %1274 = vmatprep.subr.mxu0 0.0
    %1275 = vmatpush1.msra.mxu0 0.0
    %1276 = vmatprep.subr.mxu0 0.0
    %1277 = vmatpush1.msra.mxu0 0.0
    %1278 = vmatprep.subr.mxu0 0.0
    %1279 = vmatpush1.msra.mxu0 0.0
    %1280 = vmatprep.subr.mxu0 0.0
    %1281 = vmatpush1.msra.mxu0 0.0
    %1282 = vmatprep.subr.mxu0 0.0
    %1283 = vmatpush1.msra.mxu0 0.0
    %1284 = vmatprep.subr.mxu0 0.0
    %1285 = vmatpush1.msra.mxu0 0.0
    %1286 = vmatprep.subr.mxu0 0.0
    %1287 = vmatpush1.msra.mxu0 0.0
    %1288 = vmatprep.subr.mxu0 0.0
    %1289 = vmatpush1.msra.mxu0 0.0
    %1290 = vmatprep.subr.mxu0 0.0
    %1291 = vmatpush1.msra.mxu0 0.0
    %1292 = vmatprep.subr.mxu0 0.0
    %1293 = vmatpush1.msra.mxu0 0.0
    %1294 = vmatprep.subr.mxu0 0.0
    %1295 = vmatpush1.msra.mxu0 0.0
    %1296 = vmatprep.subr.mxu0 0.0
    %1297 = vmatpush1.msra.mxu0 0.0
    %1298 = vmatprep.subr.mxu0 0.0
    %1299 = vmatpush1.msra.mxu0 0.0
    %1300 = vmatprep.subr.mxu0 0.0
    %1301 = vmatpush1.msra.mxu0 0.0
    %1302 = vmatprep.subr.mxu0 0.0
    %1303 = vmatpush1.msra.mxu0 0.0
    %1304 = vmatprep.subr.mxu0 0.0
    %1305 = vmatpush1.msra.mxu0 0.0
    %1306 = vmatprep.subr.mxu0 0.0
    %1307 = vmatpush1.msra.mxu0 0.0
    %1308 = vmatprep.subr.mxu0 0.0
    %1309 = vmatpush1.msra.mxu0 0.0
    %1310 = vmatprep.subr.mxu0 0.0
    %1311 = vmatpush1.msra.mxu0 0.0
    %1312 = vmatprep.subr.mxu0 0.0
    %1313 = vmatpush1.msra.mxu0 0.0
    %1314 = vmatprep.subr.mxu0 0.0
    %1315 = vmatpush1.msra.mxu0 0.0
    %1316 = vmatprep.mubr.f32.mxu0 0.0
    %1317 = vmatmul.mubr.f32.gmra.mrb[0].mxu0 %v1244
    %v1318 = vpop.f32.mrb[0].mxu0
    %v1319 = vadd.f32 %v1242, %v1318
    %v1320 = vpop.f32.mrb[0].mxu0
    %1321 = vmatprep.mubr.f32.mxu0 0.0
    %1322 = vmatmul.mubr.f32.gmra.mrb[0].mxu0 %v1247
    %v1323 = vpop.f32.mrb[0].mxu0
    %v1324 = vadd.f32 %v1242, %v1323
    %v1325 = vpop.f32.mrb[0].mxu0
    %1326 = vdwg.mxu0
    %v1327 = vmax.f32 %v1319, 0.0
    %v1328 = vmax.f32 %v1324, 0.0
    %v1329 = vld [vmem:[#allocation6 + $0xc6] sm:$0x1]
    %v1330 = vlaneseq
    %v1331 = vshrl.u32 %v1330, 7
    %v1332 = vsub.s32 0, %v1331
    %v1333 = vrot.slane %v1329, %v1332
    %vm1334 = vcmask 523264
    %v1336 = vsel %vm1334, %v1327, 0
    %v1339 = vsel %vm1334, %v1328, 0
    %1341 = vmatprep.subr.mxu0 0.0
    %1342 = vmatpush1.msra.mxu0 %v173
    %1343 = vmatprep.subr.mxu0 0.0
    %1344 = vmatpush1.msra.mxu0 %v174
    %1345 = vmatprep.subr.mxu0 0.0
    %1346 = vmatpush1.msra.mxu0 %v175
    %1347 = vmatprep.subr.mxu0 0.0
    %1348 = vmatpush1.msra.mxu0 %v176
    %1349 = vmatprep.subr.mxu0 0.0
    %1350 = vmatpush1.msra.mxu0 %v177
    %1351 = vmatprep.subr.mxu0 0.0
    %1352 = vmatpush1.msra.mxu0 %v178
    %1353 = vmatprep.subr.mxu0 0.0
    %1354 = vmatpush1.msra.mxu0 %v179
    %1355 = vmatprep.subr.mxu0 0.0
    %1356 = vmatpush1.msra.mxu0 %v180
    %1357 = vmatprep.subr.mxu0 0.0
    %1358 = vmatpush1.msra.mxu0 0.0
    %1359 = vmatprep.subr.mxu0 0.0
    %1360 = vmatpush1.msra.mxu0 0.0
    %1361 = vmatprep.subr.mxu0 0.0
    %1362 = vmatpush1.msra.mxu0 0.0
    %1363 = vmatprep.subr.mxu0 0.0
    %1364 = vmatpush1.msra.mxu0 0.0
    %1365 = vmatprep.subr.mxu0 0.0
    %1366 = vmatpush1.msra.mxu0 0.0
    %1367 = vmatprep.subr.mxu0 0.0
    %1368 = vmatpush1.msra.mxu0 0.0
    %1369 = vmatprep.subr.mxu0 0.0
    %1370 = vmatpush1.msra.mxu0 0.0
    %1371 = vmatprep.subr.mxu0 0.0
    %1372 = vmatpush1.msra.mxu0 0.0
    %1373 = vmatprep.subr.mxu0 0.0
    %1374 = vmatpush1.msra.mxu0 0.0
    %1375 = vmatprep.subr.mxu0 0.0
    %1376 = vmatpush1.msra.mxu0 0.0
    %1377 = vmatprep.subr.mxu0 0.0
    %1378 = vmatpush1.msra.mxu0 0.0
    %1379 = vmatprep.subr.mxu0 0.0
    %1380 = vmatpush1.msra.mxu0 0.0
    %1381 = vmatprep.subr.mxu0 0.0
    %1382 = vmatpush1.msra.mxu0 0.0
    %1383 = vmatprep.subr.mxu0 0.0
    %1384 = vmatpush1.msra.mxu0 0.0
    %1385 = vmatprep.subr.mxu0 0.0
    %1386 = vmatpush1.msra.mxu0 0.0
    %1387 = vmatprep.subr.mxu0 0.0
    %1388 = vmatpush1.msra.mxu0 0.0
    %1389 = vmatprep.subr.mxu0 0.0
    %1390 = vmatpush1.msra.mxu0 0.0
    %1391 = vmatprep.subr.mxu0 0.0
    %1392 = vmatpush1.msra.mxu0 0.0
    %1393 = vmatprep.subr.mxu0 0.0
    %1394 = vmatpush1.msra.mxu0 0.0
    %1395 = vmatprep.subr.mxu0 0.0
    %1396 = vmatpush1.msra.mxu0 0.0
    %1397 = vmatprep.subr.mxu0 0.0
    %1398 = vmatpush1.msra.mxu0 0.0
    %1399 = vmatprep.subr.mxu0 0.0
    %1400 = vmatpush1.msra.mxu0 0.0
    %1401 = vmatprep.subr.mxu0 0.0
    %1402 = vmatpush1.msra.mxu0 0.0
    %1403 = vmatprep.subr.mxu0 0.0
    %1404 = vmatpush1.msra.mxu0 0.0
    %1405 = vmatprep.mubr.f32.mxu0 0.0
    %1406 = vmatmul.mubr.f32.gmra.mrb[0].mxu0 %v1336
    %v1407 = vpop.f32.mrb[0].mxu0
    %v1408 = vadd.f32 %v1333, %v1407
    %v1409 = vpop.f32.mrb[0].mxu0
    %1410 = vmatprep.mubr.f32.mxu0 0.0
    %1411 = vmatmul.mubr.f32.gmra.mrb[0].mxu0 %v1339
    %v1412 = vpop.f32.mrb[0].mxu0
    %v1413 = vadd.f32 %v1333, %v1412
    %v1414 = vpop.f32.mrb[0].mxu0
    %1415 = vdwg.mxu0
    %v1416 = vadd.f32 %v1236, %v1408
    %v1417 = vadd.f32 %v1237, %v1413
    %v1418 = vld [vmem:[#allocation6 + $0xc7] sm:$0x1]
    %v1419 = vld [vmem:[#allocation6 + $0xc8] sm:$0x1]
    %v1420 = vsel %vm219, %v1416, 0.0
    %1421 = vadd.xlane.f32.xlu0 %v1420
    %v1422 = vpop.xlane.xlu0 %1421
    %v1423 = vsel %vm219, %v1417, 0.0
    %1424 = vadd.xlane.f32.xlu0 %v1423
    %v1425 = vpop.xlane.xlu0 %1424
    %v1426 = vmul.f32 %v1422, %v1205
    %v1427 = vmul.f32 %v1425, %v1205
    %v1428 = vsub.f32 %v1416, %v1426
    %v1429 = vsub.f32 %v1417, %v1427
    %v1430 = vmul.f32 %v1428, %v1428
    %v1431 = vmul.f32 %v1429, %v1429
    %v1432 = vsel %vm219, %v1430, 0.0
    %1433 = vadd.xlane.f32.xlu0 %v1432
    %v1434 = vpop.xlane.xlu0 %1433
    %v1435 = vsel %vm219, %v1431, 0.0
    %1436 = vadd.xlane.f32.xlu0 %v1435
    %v1437 = vpop.xlane.xlu0 %1436
    %v1438 = vmul.f32 %v1434, %v1205
    %v1439 = vmul.f32 %v1437, %v1205
    %v1440 = vadd.f32 %v1438, 1e-05
    %v1441 = vadd.f32 %v1439, 1e-05
    %v1442 = vrsqrt.pop %v1440
    %v1443 = vrsqrt.pop %v1441
    %v1444 = vmul.f32 %v1428, %v1442
    %v1445 = vmul.f32 %v1429, %v1443
    %v1446 = vlaneseq
    %v1447 = vshrl.u32 %v1446, 7
    %v1448 = vsub.s32 0, %v1447
    %v1449 = vrot.slane %v1418, %v1448
    %v1450 = vmul.f32 %v1444, %v1449
    %v1451 = vmul.f32 %v1445, %v1449
    %v1452 = vlaneseq
    %v1453 = vshrl.u32 %v1452, 7
    %v1454 = vsub.s32 0, %v1453
    %v1455 = vrot.slane %v1419, %v1454
    %v1456 = vadd.f32 %v1450, %v1455
    %v1457 = vadd.f32 %v1451, %v1455
    %v1458 = vld [vmem:[#allocation6 + $0xc9] sm:$0x1]
    %v1459 = vlaneseq
    %v1460 = vshrl.u32 %v1459, 7
    %v1461 = vsub.s32 0, %v1460
    %v1462 = vrot.slane %v1458, %v1461
    %v1464 = vsel %vm219, %v1456, 0
    %v1467 = vsel %vm219, %v1457, 0
    %v1470 = vsel %vm224, %v182, 0
    %1472 = vmatprep.subr.mxu0 0.0
    %1473 = vmatpush1.msra.mxu0 %v181
    %1474 = vmatprep.subr.mxu0 0.0
    %1475 = vmatpush1.msra.mxu0 %v1470
    %1476 = vmatprep.subr.mxu0 0.0
    %1477 = vmatpush1.msra.mxu0 0.0
    %1478 = vmatprep.subr.mxu0 0.0
    %1479 = vmatpush1.msra.mxu0 0.0
    %1480 = vmatprep.subr.mxu0 0.0
    %1481 = vmatpush1.msra.mxu0 0.0
    %1482 = vmatprep.subr.mxu0 0.0
    %1483 = vmatpush1.msra.mxu0 0.0
    %1484 = vmatprep.subr.mxu0 0.0
    %1485 = vmatpush1.msra.mxu0 0.0
    %1486 = vmatprep.subr.mxu0 0.0
    %1487 = vmatpush1.msra.mxu0 0.0
    %1488 = vmatprep.subr.mxu0 0.0
    %1489 = vmatpush1.msra.mxu0 0.0
    %1490 = vmatprep.subr.mxu0 0.0
    %1491 = vmatpush1.msra.mxu0 0.0
    %1492 = vmatprep.subr.mxu0 0.0
    %1493 = vmatpush1.msra.mxu0 0.0
    %1494 = vmatprep.subr.mxu0 0.0
    %1495 = vmatpush1.msra.mxu0 0.0
    %1496 = vmatprep.subr.mxu0 0.0
    %1497 = vmatpush1.msra.mxu0 0.0
    %1498 = vmatprep.subr.mxu0 0.0
    %1499 = vmatpush1.msra.mxu0 0.0
    %1500 = vmatprep.subr.mxu0 0.0
    %1501 = vmatpush1.msra.mxu0 0.0
    %1502 = vmatprep.subr.mxu0 0.0
    %1503 = vmatpush1.msra.mxu0 0.0
    %1504 = vmatprep.subr.mxu0 0.0
    %1505 = vmatpush1.msra.mxu0 0.0
    %1506 = vmatprep.subr.mxu0 0.0
    %1507 = vmatpush1.msra.mxu0 0.0
    %1508 = vmatprep.subr.mxu0 0.0
    %1509 = vmatpush1.msra.mxu0 0.0
    %1510 = vmatprep.subr.mxu0 0.0
    %1511 = vmatpush1.msra.mxu0 0.0
    %1512 = vmatprep.subr.mxu0 0.0
    %1513 = vmatpush1.msra.mxu0 0.0
    %1514 = vmatprep.subr.mxu0 0.0
    %1515 = vmatpush1.msra.mxu0 0.0
    %1516 = vmatprep.subr.mxu0 0.0
    %1517 = vmatpush1.msra.mxu0 0.0
    %1518 = vmatprep.subr.mxu0 0.0
    %1519 = vmatpush1.msra.mxu0 0.0
    %1520 = vmatprep.subr.mxu0 0.0
    %1521 = vmatpush1.msra.mxu0 0.0
    %1522 = vmatprep.subr.mxu0 0.0
    %1523 = vmatpush1.msra.mxu0 0.0
    %1524 = vmatprep.subr.mxu0 0.0
    %1525 = vmatpush1.msra.mxu0 0.0
    %1526 = vmatprep.subr.mxu0 0.0
    %1527 = vmatpush1.msra.mxu0 0.0
    %1528 = vmatprep.subr.mxu0 0.0
    %1529 = vmatpush1.msra.mxu0 0.0
    %1530 = vmatprep.subr.mxu0 0.0
    %1531 = vmatpush1.msra.mxu0 0.0
    %1532 = vmatprep.subr.mxu0 0.0
    %1533 = vmatpush1.msra.mxu0 0.0
    %1534 = vmatprep.subr.mxu0 0.0
    %1535 = vmatpush1.msra.mxu0 0.0
    %1536 = vmatprep.mubr.f32.mxu0 0.0
    %1537 = vmatmul.mubr.f32.gmra.mrb[0].mxu0 %v1464
    %v1538 = vpop.f32.mrb[0].mxu0
    %v1539 = vadd.f32 %v1462, %v1538
    %v1540 = vpop.f32.mrb[0].mxu0
    %1541 = vmatprep.mubr.f32.mxu0 0.0
    %1542 = vmatmul.mubr.f32.gmra.mrb[0].mxu0 %v1467
    %v1543 = vpop.f32.mrb[0].mxu0
    %v1544 = vadd.f32 %v1462, %v1543
    %v1545 = vpop.f32.mrb[0].mxu0
    %1546 = vdwg.mxu0
    %s1547 = sld [smem:[#allocation8]]
    %v1548 = vstv %s1547
    %v1549 = vmul.f32 %v1548, %v480
    %v1550 = vmul.f32 %v1548, %v481
    %s1551 = sld [smem:[#allocation8 + $0x1]]
    %v1552 = vstv %s1551
    %v1553 = vmul.f32 %v1552, %v1539
    %v1554 = vmul.f32 %v1552, %v1544
    %v1555 = vadd.f32 %v1549, %v1553
    %v1556 = vadd.f32 %v1550, %v1554
    %v1557 = vld [vmem:[#allocation6 + $0xca] sm:$0x1]
    %v1558 = vlaneseq
    %v1559 = vshrl.u32 %v1558, 7
    %v1560 = vsub.s32 0, %v1559
    %v1561 = vrot.slane %v1557, %v1560
    %v1563 = vsel %vm772, %v1555, 0
    %v1566 = vsel %vm772, %v1556, 0
    %1568 = vmatprep.subr.mxu0 0.0
    %1569 = vmatpush1.msra.mxu0 %v183
    %1570 = vmatprep.subr.mxu0 0.0
    %1571 = vmatpush1.msra.mxu0 %v184
    %1572 = vmatprep.subr.mxu0 0.0
    %1573 = vmatpush1.msra.mxu0 0.0
    %1574 = vmatprep.subr.mxu0 0.0
    %1575 = vmatpush1.msra.mxu0 0.0
    %1576 = vmatprep.subr.mxu0 0.0
    %1577 = vmatpush1.msra.mxu0 0.0
    %1578 = vmatprep.subr.mxu0 0.0
    %1579 = vmatpush1.msra.mxu0 0.0
    %1580 = vmatprep.subr.mxu0 0.0
    %1581 = vmatpush1.msra.mxu0 0.0
    %1582 = vmatprep.subr.mxu0 0.0
    %1583 = vmatpush1.msra.mxu0 0.0
    %1584 = vmatprep.subr.mxu0 0.0
    %1585 = vmatpush1.msra.mxu0 0.0
    %1586 = vmatprep.subr.mxu0 0.0
    %1587 = vmatpush1.msra.mxu0 0.0
    %1588 = vmatprep.subr.mxu0 0.0
    %1589 = vmatpush1.msra.mxu0 0.0
    %1590 = vmatprep.subr.mxu0 0.0
    %1591 = vmatpush1.msra.mxu0 0.0
    %1592 = vmatprep.subr.mxu0 0.0
    %1593 = vmatpush1.msra.mxu0 0.0
    %1594 = vmatprep.subr.mxu0 0.0
    %1595 = vmatpush1.msra.mxu0 0.0
    %1596 = vmatprep.subr.mxu0 0.0
    %1597 = vmatpush1.msra.mxu0 0.0
    %1598 = vmatprep.subr.mxu0 0.0
    %1599 = vmatpush1.msra.mxu0 0.0
    %1600 = vmatprep.subr.mxu0 0.0
    %1601 = vmatpush1.msra.mxu0 0.0
    %1602 = vmatprep.subr.mxu0 0.0
    %1603 = vmatpush1.msra.mxu0 0.0
    %1604 = vmatprep.subr.mxu0 0.0
    %1605 = vmatpush1.msra.mxu0 0.0
    %1606 = vmatprep.subr.mxu0 0.0
    %1607 = vmatpush1.msra.mxu0 0.0
    %1608 = vmatprep.subr.mxu0 0.0
    %1609 = vmatpush1.msra.mxu0 0.0
    %1610 = vmatprep.subr.mxu0 0.0
    %1611 = vmatpush1.msra.mxu0 0.0
    %1612 = vmatprep.subr.mxu0 0.0
    %1613 = vmatpush1.msra.mxu0 0.0
    %1614 = vmatprep.subr.mxu0 0.0
    %1615 = vmatpush1.msra.mxu0 0.0
    %1616 = vmatprep.subr.mxu0 0.0
    %1617 = vmatpush1.msra.mxu0 0.0
    %1618 = vmatprep.subr.mxu0 0.0
    %1619 = vmatpush1.msra.mxu0 0.0
    %1620 = vmatprep.subr.mxu0 0.0
    %1621 = vmatpush1.msra.mxu0 0.0
    %1622 = vmatprep.subr.mxu0 0.0
    %1623 = vmatpush1.msra.mxu0 0.0
    %1624 = vmatprep.subr.mxu0 0.0
    %1625 = vmatpush1.msra.mxu0 0.0
    %1626 = vmatprep.subr.mxu0 0.0
    %1627 = vmatpush1.msra.mxu0 0.0
    %1628 = vmatprep.subr.mxu0 0.0
    %1629 = vmatpush1.msra.mxu0 0.0
    %1630 = vmatprep.subr.mxu0 0.0
    %1631 = vmatpush1.msra.mxu0 0.0
    %1632 = vmatprep.mubr.f32.mxu0 0.0
    %1633 = vmatmul.mubr.f32.gmra.mrb[0].mxu0 %v1563
    %v1634 = vpop.f32.mrb[0].mxu0
    %v1635 = vadd.f32 %v1561, %v1634
    %v1636 = vpop.f32.mrb[0].mxu0
    %1637 = vmatprep.mubr.f32.mxu0 0.0
    %1638 = vmatmul.mubr.f32.gmra.mrb[0].mxu0 %v1566
    %v1639 = vpop.f32.mrb[0].mxu0
    %v1640 = vadd.f32 %v1561, %v1639
    %v1641 = vpop.f32.mrb[0].mxu0
    %1642 = vdwg.mxu0
    %1643 = vst.msk [vmem:[#allocation9] sm:$0xff] %vm772, %v1635
    %1644 = vst.msk [vmem:[#allocation9 + $0x8] sm:$0xff] %vm772, %v1640
    // Predicated region
    $region26: #{mynet_forward.1} parent=1 // pred_check
      _
    $region27: #{mynet_forward.1} parent=1 // pred_check_branch
      %1646 = sbr.rel (0) target = $region29
    $region28: #{mynet_forward.1} parent=1 // pred_region
      %s1648 = ssub.s32 256, 256
      %1649 = vsyncadd [#allocation4], %s1648
      %s1650 = sshll.u32 [#allocation9], 4
      %s1651 = int_to_ptr.vmem [resolvable:$true] %s1650
      %1656 = dma.vmem_to_hbm [thread:$0]  %s1651, 256, %s3, [#allocation4], 128, 128, 8
    $region29: #{mynet_forward.1} parent=1 // pred_fallthru
      _
    // Predicated region
    $region30: #{mynet_forward.1} parent=1 // pred_check
      _
    $region31: #{mynet_forward.1} parent=1 // pred_check_branch
      %1658 = sbr.rel (0) target = $region33
    $region32: #{mynet_forward.1} parent=1 // pred_region
      %1659 = dma.done [#allocation4], 256
    $region33: #{mynet_forward.1} parent=1 // pred_fallthru
      _
    %1660 = vsyncpa [#allocation3], 1
    %1661 = vsyncpa [#allocation7], 1
    %1662 = vsyncpa [#allocation4], 1
    %1663 = vsyncpa [#allocation5], 1

</llo_original>
